<compile_context>
chip_gen: v5e
topology: v5e:2x2
jax: 0.10.0
libtpu: 0.0.40
codegen_flags: <defaults>
</compile_context>

<pallas_src>
import functools

import numpy as np
import jax
import jax.numpy as jnp
from jax import lax
from jax.experimental import pallas as pl
from jax.experimental.pallas import tpu as pltpu


# ----------------------------------------------------------------------------
# Pass 1 (Pallas): sub-pixel transposed conv + fused BatchNorm partial sums.
# One grid step == one batch sample.
# ----------------------------------------------------------------------------
def _convt_bn_stats_kernel(x_ref, w_ref, y_ref, stat_ref, *,
                           S, T, P, Hq, Wq, W_pad, pad_lo):
    # x_ref:    (1, Cin, H_pad*W_pad)     zero-padded input, flattened spatial
    # w_ref:    (S*S*T*T, Cout, Cin)      per-phase / per-tap weight slices
    # y_ref:    (1, S*S, Cout, Hq*W_pad)  conv output, phase-major, lane-dense
    # stat_ref: (1, Cout, 2)              per-sample [sum, sum_sq] per channel
    cout = w_ref.shape[1]
    mq = Hq * W_pad

    # Columns with (m mod W_pad) >= Wq are horizontal-halo garbage: exclude
    # them from the BN statistics here; they are sliced off in the epilogue.
    col = lax.broadcasted_iota(jnp.int32, (1, mq), 1)
    valid = (col % W_pad) < Wq

    ssum = jnp.zeros((cout, 1), jnp.float32)
    ssq = jnp.zeros((cout, 1), jnp.float32)
    win_cache = {}                       # de-dup identical shifted windows
    for p in range(S * S):               # static unroll over sub-pixel phases
        r_h, r_w = p // S, p % S
        q0_h, q0_w = (r_h + P) // S, (r_w + P) // S
        acc = jnp.zeros((cout, mq), jnp.float32)
        for t_h in range(T):             # static unroll over taps
            for t_w in range(T):
                base = (q0_h - t_h + pad_lo) * W_pad + (q0_w - t_w + pad_lo)
                if base not in win_cache:
                    win_cache[base] = x_ref[0, :, base:base + mq]  # [Cin, mq]
                wt = w_ref[p * T * T + t_h * T + t_w]              # [Cout,Cin]
                acc = acc + jnp.dot(wt, win_cache[base],
                                    preferred_element_type=jnp.float32)
        y_ref[0, p] = acc.astype(y_ref.dtype)
        av = jnp.where(valid, acc, 0.0)
        ssum = ssum + jnp.sum(av, axis=1, keepdims=True)
        ssq = ssq + jnp.sum(av * av, axis=1, keepdims=True)
    stat_ref[0, :, 0:1] = ssum
    stat_ref[0, :, 1:2] = ssq


def _convt_bn_stats(x_flat, w_taps, *, S, T, P, Hq, Wq, W_pad, pad_lo,
                    out_dtype=jnp.float32):
    N, Cin, Mflat = x_flat.shape
    n_tap, Cout, _ = w_taps.shape
    NP = S * S
    mq = Hq * W_pad
    kernel = functools.partial(
        _convt_bn_stats_kernel,
        S=S, T=T, P=P, Hq=Hq, Wq=Wq, W_pad=W_pad, pad_lo=pad_lo)
    return pl.pallas_call(
        kernel,
        out_shape=(
            jax.ShapeDtypeStruct((N, NP, Cout, mq), out_dtype),
            jax.ShapeDtypeStruct((N, Cout, 2), jnp.float32),
        ),
        grid=(N,),
        in_specs=[
            # one sample per step: the input is read from HBM exactly once
            pl.BlockSpec((1, Cin, Mflat), lambda n: (n, 0, 0)),
            # stationary weights: constant block index -> fetched once
            pl.BlockSpec((n_tap, Cout, Cin), lambda n: (0, 0, 0)),
        ],
        out_specs=(
            pl.BlockSpec((1, NP, Cout, mq), lambda n: (n, 0, 0, 0)),
            pl.BlockSpec((1, Cout, 2), lambda n: (n, 0, 0)),
        ),
        compiler_params=pltpu.CompilerParams(
            # batch axis feeds both v7x TensorCores; v5e/v6e run it serially.
            dimension_semantics=("parallel",),
            # explicit scoped-VMEM budget (v5e default is only 16 MiB).
            vmem_limit_bytes=32 * 1024 * 1024,
        ),
    )(x_flat, w_taps)


def _build_tap_weights(w, K, S, P, T):
    """w: [Cin, Cout, K, K] -> [S*S*T*T, Cout, Cin] per-phase/per-tap slices."""
    Cin, Cout = w.shape[0], w.shape[1]
    taps = []
    for p in range(S * S):
        r_h, r_w = p // S, p % S
        ph_h, ph_w = (r_h + P) % S, (r_w + P) % S
        for t_h in range(T):
            for t_w in range(T):
                kh, kw = ph_h + t_h * S, ph_w + t_w * S
                if kh < K and kw < K:
                    taps.append(w[:, :, kh, kw].T)            # [Cout, Cin]
                else:   # tap outside the kernel window: contributes zero
                    taps.append(jnp.zeros((Cout, Cin), w.dtype))
    return jnp.stack(taps, axis=0)


def upsample_forward(x, w, bias, gamma, beta, K, S, P):
    """ConvTranspose2d -> Dropout2d(identity) -> BatchNorm2d(train) -> LeakyReLU(0.2).

    x: [N, Cin, H, W]; w: [Cin, Cout, K, K] (PyTorch ConvTranspose2d layout).
    The conv bias is dropped: training-mode BatchNorm subtracts the per-channel
    mean, which cancels any per-channel constant exactly (valid because
    Dropout2d is treated as identity here).
    """
    del bias
    N, Cin, H, W = x.shape
    Cout = w.shape[1]
    H_out = (H - 1) * S - 2 * P + K
    W_out = (W - 1) * S - 2 * P + K

    if S > 1 and (K - 2 * P) % S != 0:
        # Irregular per-phase output sizes: fall back to the stride-1 phase
        # path on a zero-dilated input.
        # TODO(synk): handle ragged per-phase sizes with masking instead of
        # dilation (S^2 x more input traffic) if such configs ever ship.
        Hd, Wd = (H - 1) * S + 1, (W - 1) * S + 1
        x = jnp.zeros((N, Cin, Hd, Wd), x.dtype).at[:, :, ::S, ::S].set(x)
        S = 1
        N, Cin, H, W = x.shape

    NP = S * S
    T = -(-K // S)                        # ceil(K/S): taps per phase per axis
    Hq, Wq = H_out // S, W_out // S
    q0_max = (S - 1 + P) // S
    pad_lo = T - 1
    # per-axis high padding (fixes the non-square-input bug); +1 extra bottom
    # row keeps every flattened per-tap window strictly in-bounds.
    pad_hi_h = max(0, q0_max + Hq - H) + 1
    pad_hi_w = max(0, q0_max + Wq - W)
    x_pad = jnp.pad(x.astype(jnp.float32),
                    ((0, 0), (0, 0), (pad_lo, pad_hi_h), (pad_lo, pad_hi_w)))
    H_pad, W_pad = H + pad_lo + pad_hi_h, W + pad_lo + pad_hi_w
    x_flat = x_pad.reshape(N, Cin, H_pad * W_pad)   # merges trailing dims only

    w_taps = _build_tap_weights(w.astype(jnp.float32), K, S, P, T)

    # Pass 1 (Pallas): transposed conv (all phases) + BN partial sums.
    y, stats = _convt_bn_stats(x_flat, w_taps, S=S, T=T, P=P,
                               Hq=Hq, Wq=Wq, W_pad=W_pad, pad_lo=pad_lo)

    # TODO(synk): Dropout2d is stochastic; implemented as identity (eval mode).

    # Global training-mode BatchNorm statistics (biased variance over N*H*W).
    count = jnp.float32(N * NP * Hq * Wq)           # == N * H_out * W_out
    tot = jnp.sum(stats, axis=0)                    # [Cout, 2]
    mean = tot[:, 0] / count
    var = tot[:, 1] / count - mean * mean           # NOTE: E[x^2]-mean^2 (f32)
    inv = lax.rsqrt(var + 1e-5)
    scale = gamma * inv
    shift = beta - mean * scale

    # Folded BN + LeakyReLU + pixel-shuffle back to NCHW.  Left in jnp so XLA
    # fuses it into a single read of y and a single write of the final output
    # (review: pass-2 + transpose collapsed into one HBM pass).
    z = y.reshape(N, S, S, Cout, Hq, W_pad)[..., :Wq]
    z = z * scale[None, None, None, :, None, None] \
        + shift[None, None, None, :, None, None]
    z = jnp.where(z >= 0, z, 0.2 * z)
    out = z.transpose(0, 3, 4, 1, 5, 2).reshape(N, Cout, Hq * S, Wq * S)
    return out


# ----------------------------------------------------------------------------
# Pure-JAX reference (for verification)
# ----------------------------------------------------------------------------
def reference_forward(x, w, bias, gamma, beta, K, S, P):
    w_t = jnp.flip(w, axis=(2, 3)).transpose(1, 0, 2, 3)   # [Cout, Cin, K, K]
    pad = K - 1 - P
    y = lax.conv_general_dilated(
        x, w_t, window_strides=(1, 1),
        padding=[(pad, pad), (pad, pad)],
        lhs_dilation=(S, S),
        dimension_numbers=("NCHW", "OIHW", "NCHW"),
        precision=lax.Precision.HIGHEST,
    ) + bias[None, :, None, None]
    mean = jnp.mean(y, axis=(0, 2, 3), keepdims=True)
    var = jnp.mean((y - mean) ** 2, axis=(0, 2, 3), keepdims=True)
    z = (y - mean) * lax.rsqrt(var + 1e-5) * gamma[None, :, None, None] \
        + beta[None, :, None, None]
    return jnp.where(z >= 0, z, 0.2 * z)


if __name__ == "__main__":
    # upsample(in_channel=4, kernel=4, stride=2, padding=1)
    N, Cin, H, W = 2, 4, 16, 16
    K, S, P = 4, 2, 1
    Cout = Cin // 2

    key = jax.random.PRNGKey(0)
    k1, k2, k3, k4, k5 = jax.random.split(key, 5)
    x = jax.random.normal(k1, (N, Cin, H, W), jnp.float32)
    w = 0.1 * jax.random.normal(k2, (Cin, Cout, K, K), jnp.float32)
    bias = 0.1 * jax.random.normal(k3, (Cout,), jnp.float32)
    gamma = 1.0 + 0.1 * jax.random.normal(k4, (Cout,), jnp.float32)
    beta = 0.1 * jax.random.normal(k5, (Cout,), jnp.float32)

    fwd = jax.jit(upsample_forward, static_argnums=(5, 6, 7))
    out = jax.block_until_ready(fwd(x, w, bias, gamma, beta, K, S, P))

    H_out = (H - 1) * S - 2 * P + K
    assert out.shape == (N, Cout, H_out, H_out), out.shape

    ref = jax.block_until_ready(
        reference_forward(x, w, bias, gamma, beta, K, S, P))
    # Tolerance sized to cover MXU default-precision f32 matmuls on every TPU
    # generation; real indexing / weight-mapping bugs produce O(1) errors.
    np.testing.assert_allclose(np.asarray(out), np.asarray(ref),
                               rtol=2e-2, atol=2e-2)
    print("KERNEL_OK")
</pallas_src>

<mosaic_0001>
module attributes {stable_mosaic.version = 11 : i64} {
  func.func @_convt_bn_stats_kernel(%arg0: i32, %arg1: memref<1x4x342xf32, #tpu.memory_space<vmem>>, %arg2: memref<16x2x4xf32, #tpu.memory_space<vmem>>, %arg3: memref<1x4x2x288xf32, #tpu.memory_space<vmem>>, %arg4: memref<1x2x2xf32, #tpu.memory_space<vmem>>) attributes {dimension_semantics = [#tpu.dimension_semantics<parallel>], iteration_bounds = array<i64: 2>, scalar_prefetch = 0 : i64, scratch_operands = 0 : i64, tpu.core_type = #tpu.core_type<tc>, window_params = [{transform_indices = @transform_0, window_bounds = array<i64: 1, 4, 342>}, {pipeline_mode = #tpu.pipeline_mode<synchronous>, transform_indices = @transform_1, window_bounds = array<i64: 16, 2, 4>}, {transform_indices = @transform_2, window_bounds = array<i64: 1, 4, 2, 288>}, {transform_indices = @transform_3, window_bounds = array<i64: 1, 2, 2>}]} {
    %0 = tpu.iota {dimensions = array<i32: 1>} : vector<1x288xi32>
    %c18_i32 = arith.constant 18 : i32
    %c0_i32 = arith.constant 0 : i32
    %1 = arith.cmpi eq, %c18_i32, %c0_i32 : i32
    %c1_i32 = arith.constant 1 : i32
    %2 = arith.select %1, %c1_i32, %c18_i32 : i32
    %3 = vector.broadcast %2 : i32 to vector<1x288xi32>
    %4 = arith.remsi %0, %3 : vector<1x288xi32>
    %c0_i32_0 = arith.constant 0 : i32
    %5 = vector.broadcast %c0_i32_0 : i32 to vector<1x288xi32>
    %6 = arith.cmpi ne, %4, %5 : vector<1x288xi32>
    %c0_i32_1 = arith.constant 0 : i32
    %7 = vector.broadcast %c0_i32_1 : i32 to vector<1x288xi32>
    %8 = arith.cmpi slt, %4, %7 : vector<1x288xi32>
    %c0_i32_2 = arith.constant 0 : i32
    %9 = arith.cmpi slt, %2, %c0_i32_2 : i32
    %10 = vector.broadcast %9 : i1 to vector<1x288xi1>
    %11 = vector.broadcast %10 : vector<1x288xi1> to vector<1x288xi1>
    %12 = arith.xori %8, %11 : vector<1x288xi1>
    %13 = arith.andi %12, %6 : vector<1x288xi1>
    %14 = vector.broadcast %2 : i32 to vector<1x288xi32>
    %15 = arith.addi %4, %14 : vector<1x288xi32>
    %16 = arith.select %13, %15, %4 : vector<1x288xi1>, vector<1x288xi32>
    %c16_i32 = arith.constant 16 : i32
    %17 = vector.broadcast %c16_i32 : i32 to vector<1x288xi32>
    %18 = arith.cmpi slt, %16, %17 : vector<1x288xi32>
    %cst = arith.constant 0.000000e+00 : f32
    %19 = vector.broadcast %cst : f32 to vector<2x1xf32>
    %cst_3 = arith.constant 0.000000e+00 : f32
    %20 = vector.broadcast %cst_3 : f32 to vector<2x1xf32>
    %cst_4 = arith.constant 0.000000e+00 : f32
    %21 = vector.broadcast %cst_4 : f32 to vector<2x288xf32>
    %c0 = arith.constant 0 : index
    %c0_5 = arith.constant 0 : index
    %c19 = arith.constant 19 : index
    %22 = vector.load %arg1[%c0, %c0_5, %c19] : memref<1x4x342xf32, #tpu.memory_space<vmem>>, vector<1x4x288xf32>
    %23 = vector.shape_cast %22 : vector<1x4x288xf32> to vector<4x288xf32>
    %c0_6 = arith.constant 0 : index
    %c0_7 = arith.constant 0 : index
    %c0_8 = arith.constant 0 : index
    %24 = vector.load %arg2[%c0_6, %c0_7, %c0_8] : memref<16x2x4xf32, #tpu.memory_space<vmem>>, vector<1x2x4xf32>
    %25 = vector.shape_cast %24 : vector<1x2x4xf32> to vector<2x4xf32>
    %cst_9 = arith.constant dense<0.000000e+00> : vector<2x288xf32>
    %26 = tpu.matmul %25, %23, %cst_9 {dimension_numbers = #tpu.dot_dimension_numbers<[1], [0], [0], [1], [0, 0, 1, 1], [], []>} : vector<2x4xf32>, vector<4x288xf32>, vector<2x288xf32> -> vector<2x288xf32>
    %27 = arith.addf %21, %26 : vector<2x288xf32>
    %c0_10 = arith.constant 0 : index
    %c0_11 = arith.constant 0 : index
    %c18 = arith.constant 18 : index
    %28 = vector.load %arg1[%c0_10, %c0_11, %c18] : memref<1x4x342xf32, #tpu.memory_space<vmem>>, vector<1x4x288xf32>
    %29 = vector.shape_cast %28 : vector<1x4x288xf32> to vector<4x288xf32>
    %c1 = arith.constant 1 : index
    %c0_12 = arith.constant 0 : index
    %c0_13 = arith.constant 0 : index
    %30 = vector.load %arg2[%c1, %c0_12, %c0_13] : memref<16x2x4xf32, #tpu.memory_space<vmem>>, vector<1x2x4xf32>
    %31 = vector.shape_cast %30 : vector<1x2x4xf32> to vector<2x4xf32>
    %cst_14 = arith.constant dense<0.000000e+00> : vector<2x288xf32>
    %32 = tpu.matmul %31, %29, %cst_14 {dimension_numbers = #tpu.dot_dimension_numbers<[1], [0], [0], [1], [0, 0, 1, 1], [], []>} : vector<2x4xf32>, vector<4x288xf32>, vector<2x288xf32> -> vector<2x288xf32>
    %33 = arith.addf %27, %32 : vector<2x288xf32>
    %c0_15 = arith.constant 0 : index
    %c0_16 = arith.constant 0 : index
    %c1_17 = arith.constant 1 : index
    %34 = vector.load %arg1[%c0_15, %c0_16, %c1_17] : memref<1x4x342xf32, #tpu.memory_space<vmem>>, vector<1x4x288xf32>
    %35 = vector.shape_cast %34 : vector<1x4x288xf32> to vector<4x288xf32>
    %c2 = arith.constant 2 : index
    %c0_18 = arith.constant 0 : index
    %c0_19 = arith.constant 0 : index
    %36 = vector.load %arg2[%c2, %c0_18, %c0_19] : memref<16x2x4xf32, #tpu.memory_space<vmem>>, vector<1x2x4xf32>
    %37 = vector.shape_cast %36 : vector<1x2x4xf32> to vector<2x4xf32>
    %cst_20 = arith.constant dense<0.000000e+00> : vector<2x288xf32>
    %38 = tpu.matmul %37, %35, %cst_20 {dimension_numbers = #tpu.dot_dimension_numbers<[1], [0], [0], [1], [0, 0, 1, 1], [], []>} : vector<2x4xf32>, vector<4x288xf32>, vector<2x288xf32> -> vector<2x288xf32>
    %39 = arith.addf %33, %38 : vector<2x288xf32>
    %c0_21 = arith.constant 0 : index
    %c0_22 = arith.constant 0 : index
    %c0_23 = arith.constant 0 : index
    %40 = vector.load %arg1[%c0_21, %c0_22, %c0_23] : memref<1x4x342xf32, #tpu.memory_space<vmem>>, vector<1x4x288xf32>
    %41 = vector.shape_cast %40 : vector<1x4x288xf32> to vector<4x288xf32>
    %c3 = arith.constant 3 : index
    %c0_24 = arith.constant 0 : index
    %c0_25 = arith.constant 0 : index
    %42 = vector.load %arg2[%c3, %c0_24, %c0_25] : memref<16x2x4xf32, #tpu.memory_space<vmem>>, vector<1x2x4xf32>
    %43 = vector.shape_cast %42 : vector<1x2x4xf32> to vector<2x4xf32>
    %cst_26 = arith.constant dense<0.000000e+00> : vector<2x288xf32>
    %44 = tpu.matmul %43, %41, %cst_26 {dimension_numbers = #tpu.dot_dimension_numbers<[1], [0], [0], [1], [0, 0, 1, 1], [], []>} : vector<2x4xf32>, vector<4x288xf32>, vector<2x288xf32> -> vector<2x288xf32>
    %45 = arith.addf %39, %44 : vector<2x288xf32>
    %c0_27 = arith.constant 0 : index
    %c0_28 = arith.constant 0 : index
    %c0_29 = arith.constant 0 : index
    %c0_30 = arith.constant 0 : index
    %46 = vector.load %arg3[%c0_27, %c0_28, %c0_29, %c0_30] : memref<1x4x2x288xf32, #tpu.memory_space<vmem>>, vector<1x1x2x288xf32>
    %47 = vector.shape_cast %46 : vector<1x1x2x288xf32> to vector<2x288xf32>
    %48 = vector.shape_cast %45 : vector<2x288xf32> to vector<1x1x2x288xf32>
    tpu.vector_store %arg3[%c0_27, %c0_28, %c0_29, %c0_30], %48 {strides = array<i32>} : memref<1x4x2x288xf32, #tpu.memory_space<vmem>>, vector<1x1x2x288xf32>,
    %cst_31 = arith.constant 0.000000e+00 : f32
    %49 = vector.shape_cast %18 : vector<1x288xi1> to vector<1x288xi1>
    %50 = vector.broadcast %49 : vector<1x288xi1> to vector<2x288xi1>
    %51 = vector.broadcast %cst_31 : f32 to vector<2x288xf32>
    %52 = arith.select %50, %45, %51 : vector<2x288xi1>, vector<2x288xf32>
    %cst_32 = arith.constant dense<0.000000e+00> : vector<2xf32>
    %53 = vector.multi_reduction <add>, %52, %cst_32 [1] : vector<2x288xf32> to vector<2xf32>
    %54 = vector.shape_cast %53 : vector<2xf32> to vector<2x1xf32>
    %55 = arith.addf %19, %54 : vector<2x1xf32>
    %56 = arith.mulf %52, %52 : vector<2x288xf32>
    %cst_33 = arith.constant dense<0.000000e+00> : vector<2xf32>
    %57 = vector.multi_reduction <add>, %56, %cst_33 [1] : vector<2x288xf32> to vector<2xf32>
    %58 = vector.shape_cast %57 : vector<2xf32> to vector<2x1xf32>
    %59 = arith.addf %20, %58 : vector<2x1xf32>
    %cst_34 = arith.constant 0.000000e+00 : f32
    %60 = vector.broadcast %cst_34 : f32 to vector<2x288xf32>
    %c0_35 = arith.constant 0 : index
    %c0_36 = arith.constant 0 : index
    %c20 = arith.constant 20 : index
    %61 = vector.load %arg1[%c0_35, %c0_36, %c20] : memref<1x4x342xf32, #tpu.memory_space<vmem>>, vector<1x4x288xf32>
    %62 = vector.shape_cast %61 : vector<1x4x288xf32> to vector<4x288xf32>
    %c4 = arith.constant 4 : index
    %c0_37 = arith.constant 0 : index
    %c0_38 = arith.constant 0 : index
    %63 = vector.load %arg2[%c4, %c0_37, %c0_38] : memref<16x2x4xf32, #tpu.memory_space<vmem>>, vector<1x2x4xf32>
    %64 = vector.shape_cast %63 : vector<1x2x4xf32> to vector<2x4xf32>
    %cst_39 = arith.constant dense<0.000000e+00> : vector<2x288xf32>
    %65 = tpu.matmul %64, %62, %cst_39 {dimension_numbers = #tpu.dot_dimension_numbers<[1], [0], [0], [1], [0, 0, 1, 1], [], []>} : vector<2x4xf32>, vector<4x288xf32>, vector<2x288xf32> -> vector<2x288xf32>
    %66 = arith.addf %60, %65 : vector<2x288xf32>
    %c5 = arith.constant 5 : index
    %c0_40 = arith.constant 0 : index
    %c0_41 = arith.constant 0 : index
    %67 = vector.load %arg2[%c5, %c0_40, %c0_41] : memref<16x2x4xf32, #tpu.memory_space<vmem>>, vector<1x2x4xf32>
    %68 = vector.shape_cast %67 : vector<1x2x4xf32> to vector<2x4xf32>
    %cst_42 = arith.constant dense<0.000000e+00> : vector<2x288xf32>
    %69 = tpu.matmul %68, %23, %cst_42 {dimension_numbers = #tpu.dot_dimension_numbers<[1], [0], [0], [1], [0, 0, 1, 1], [], []>} : vector<2x4xf32>, vector<4x288xf32>, vector<2x288xf32> -> vector<2x288xf32>
    %70 = arith.addf %66, %69 : vector<2x288xf32>
    %c0_43 = arith.constant 0 : index
    %c0_44 = arith.constant 0 : index
    %c2_45 = arith.constant 2 : index
    %71 = vector.load %arg1[%c0_43, %c0_44, %c2_45] : memref<1x4x342xf32, #tpu.memory_space<vmem>>, vector<1x4x288xf32>
    %72 = vector.shape_cast %71 : vector<1x4x288xf32> to vector<4x288xf32>
    %c6 = arith.constant 6 : index
    %c0_46 = arith.constant 0 : index
    %c0_47 = arith.constant 0 : index
    %73 = vector.load %arg2[%c6, %c0_46, %c0_47] : memref<16x2x4xf32, #tpu.memory_space<vmem>>, vector<1x2x4xf32>
    %74 = vector.shape_cast %73 : vector<1x2x4xf32> to vector<2x4xf32>
    %cst_48 = arith.constant dense<0.000000e+00> : vector<2x288xf32>
    %75 = tpu.matmul %74, %72, %cst_48 {dimension_numbers = #tpu.dot_dimension_numbers<[1], [0], [0], [1], [0, 0, 1, 1], [], []>} : vector<2x4xf32>, vector<4x288xf32>, vector<2x288xf32> -> vector<2x288xf32>
    %76 = arith.addf %70, %75 : vector<2x288xf32>
    %c7 = arith.constant 7 : index
    %c0_49 = arith.constant 0 : index
    %c0_50 = arith.constant 0 : index
    %77 = vector.load %arg2[%c7, %c0_49, %c0_50] : memref<16x2x4xf32, #tpu.memory_space<vmem>>, vector<1x2x4xf32>
    %78 = vector.shape_cast %77 : vector<1x2x4xf32> to vector<2x4xf32>
    %cst_51 = arith.constant dense<0.000000e+00> : vector<2x288xf32>
    %79 = tpu.matmul %78, %35, %cst_51 {dimension_numbers = #tpu.dot_dimension_numbers<[1], [0], [0], [1], [0, 0, 1, 1], [], []>} : vector<2x4xf32>, vector<4x288xf32>, vector<2x288xf32> -> vector<2x288xf32>
    %80 = arith.addf %76, %79 : vector<2x288xf32>
    %c0_52 = arith.constant 0 : index
    %c1_53 = arith.constant 1 : index
    %c0_54 = arith.constant 0 : index
    %c0_55 = arith.constant 0 : index
    %81 = vector.load %arg3[%c0_52, %c1_53, %c0_54, %c0_55] : memref<1x4x2x288xf32, #tpu.memory_space<vmem>>, vector<1x1x2x288xf32>
    %82 = vector.shape_cast %81 : vector<1x1x2x288xf32> to vector<2x288xf32>
    %83 = vector.shape_cast %80 : vector<2x288xf32> to vector<1x1x2x288xf32>
    tpu.vector_store %arg3[%c0_52, %c1_53, %c0_54, %c0_55], %83 {strides = array<i32>} : memref<1x4x2x288xf32, #tpu.memory_space<vmem>>, vector<1x1x2x288xf32>,
    %cst_56 = arith.constant 0.000000e+00 : f32
    %84 = vector.shape_cast %18 : vector<1x288xi1> to vector<1x288xi1>
    %85 = vector.broadcast %84 : vector<1x288xi1> to vector<2x288xi1>
    %86 = vector.broadcast %cst_56 : f32 to vector<2x288xf32>
    %87 = arith.select %85, %80, %86 : vector<2x288xi1>, vector<2x288xf32>
    %cst_57 = arith.constant dense<0.000000e+00> : vector<2xf32>
    %88 = vector.multi_reduction <add>, %87, %cst_57 [1] : vector<2x288xf32> to vector<2xf32>
    %89 = vector.shape_cast %88 : vector<2xf32> to vector<2x1xf32>
    %90 = arith.addf %55, %89 : vector<2x1xf32>
    %91 = arith.mulf %87, %87 : vector<2x288xf32>
    %cst_58 = arith.constant dense<0.000000e+00> : vector<2xf32>
    %92 = vector.multi_reduction <add>, %91, %cst_58 [1] : vector<2x288xf32> to vector<2xf32>
    %93 = vector.shape_cast %92 : vector<2xf32> to vector<2x1xf32>
    %94 = arith.addf %59, %93 : vector<2x1xf32>
    %cst_59 = arith.constant 0.000000e+00 : f32
    %95 = vector.broadcast %cst_59 : f32 to vector<2x288xf32>
    %c0_60 = arith.constant 0 : index
    %c0_61 = arith.constant 0 : index
    %c37 = arith.constant 37 : index
    %96 = vector.load %arg1[%c0_60, %c0_61, %c37] : memref<1x4x342xf32, #tpu.memory_space<vmem>>, vector<1x4x288xf32>
    %97 = vector.shape_cast %96 : vector<1x4x288xf32> to vector<4x288xf32>
    %c8 = arith.constant 8 : index
    %c0_62 = arith.constant 0 : index
    %c0_63 = arith.constant 0 : index
    %98 = vector.load %arg2[%c8, %c0_62, %c0_63] : memref<16x2x4xf32, #tpu.memory_space<vmem>>, vector<1x2x4xf32>
    %99 = vector.shape_cast %98 : vector<1x2x4xf32> to vector<2x4xf32>
    %cst_64 = arith.constant dense<0.000000e+00> : vector<2x288xf32>
    %100 = tpu.matmul %99, %97, %cst_64 {dimension_numbers = #tpu.dot_dimension_numbers<[1], [0], [0], [1], [0, 0, 1, 1], [], []>} : vector<2x4xf32>, vector<4x288xf32>, vector<2x288xf32> -> vector<2x288xf32>
    %101 = arith.addf %95, %100 : vector<2x288xf32>
    %c0_65 = arith.constant 0 : index
    %c0_66 = arith.constant 0 : index
    %c36 = arith.constant 36 : index
    %102 = vector.load %arg1[%c0_65, %c0_66, %c36] : memref<1x4x342xf32, #tpu.memory_space<vmem>>, vector<1x4x288xf32>
    %103 = vector.shape_cast %102 : vector<1x4x288xf32> to vector<4x288xf32>
    %c9 = arith.constant 9 : index
    %c0_67 = arith.constant 0 : index
    %c0_68 = arith.constant 0 : index
    %104 = vector.load %arg2[%c9, %c0_67, %c0_68] : memref<16x2x4xf32, #tpu.memory_space<vmem>>, vector<1x2x4xf32>
    %105 = vector.shape_cast %104 : vector<1x2x4xf32> to vector<2x4xf32>
    %cst_69 = arith.constant dense<0.000000e+00> : vector<2x288xf32>
    %106 = tpu.matmul %105, %103, %cst_69 {dimension_numbers = #tpu.dot_dimension_numbers<[1], [0], [0], [1], [0, 0, 1, 1], [], []>} : vector<2x4xf32>, vector<4x288xf32>, vector<2x288xf32> -> vector<2x288xf32>
    %107 = arith.addf %101, %106 : vector<2x288xf32>
    %c10 = arith.constant 10 : index
    %c0_70 = arith.constant 0 : index
    %c0_71 = arith.constant 0 : index
    %108 = vector.load %arg2[%c10, %c0_70, %c0_71] : memref<16x2x4xf32, #tpu.memory_space<vmem>>, vector<1x2x4xf32>
    %109 = vector.shape_cast %108 : vector<1x2x4xf32> to vector<2x4xf32>
    %cst_72 = arith.constant dense<0.000000e+00> : vector<2x288xf32>
    %110 = tpu.matmul %109, %23, %cst_72 {dimension_numbers = #tpu.dot_dimension_numbers<[1], [0], [0], [1], [0, 0, 1, 1], [], []>} : vector<2x4xf32>, vector<4x288xf32>, vector<2x288xf32> -> vector<2x288xf32>
    %111 = arith.addf %107, %110 : vector<2x288xf32>
    %c11 = arith.constant 11 : index
    %c0_73 = arith.constant 0 : index
    %c0_74 = arith.constant 0 : index
    %112 = vector.load %arg2[%c11, %c0_73, %c0_74] : memref<16x2x4xf32, #tpu.memory_space<vmem>>, vector<1x2x4xf32>
    %113 = vector.shape_cast %112 : vector<1x2x4xf32> to vector<2x4xf32>
    %cst_75 = arith.constant dense<0.000000e+00> : vector<2x288xf32>
    %114 = tpu.matmul %113, %29, %cst_75 {dimension_numbers = #tpu.dot_dimension_numbers<[1], [0], [0], [1], [0, 0, 1, 1], [], []>} : vector<2x4xf32>, vector<4x288xf32>, vector<2x288xf32> -> vector<2x288xf32>
    %115 = arith.addf %111, %114 : vector<2x288xf32>
    %c0_76 = arith.constant 0 : index
    %c2_77 = arith.constant 2 : index
    %c0_78 = arith.constant 0 : index
    %c0_79 = arith.constant 0 : index
    %116 = vector.load %arg3[%c0_76, %c2_77, %c0_78, %c0_79] : memref<1x4x2x288xf32, #tpu.memory_space<vmem>>, vector<1x1x2x288xf32>
    %117 = vector.shape_cast %116 : vector<1x1x2x288xf32> to vector<2x288xf32>
    %118 = vector.shape_cast %115 : vector<2x288xf32> to vector<1x1x2x288xf32>
    tpu.vector_store %arg3[%c0_76, %c2_77, %c0_78, %c0_79], %118 {strides = array<i32>} : memref<1x4x2x288xf32, #tpu.memory_space<vmem>>, vector<1x1x2x288xf32>,
    %cst_80 = arith.constant 0.000000e+00 : f32
    %119 = vector.shape_cast %18 : vector<1x288xi1> to vector<1x288xi1>
    %120 = vector.broadcast %119 : vector<1x288xi1> to vector<2x288xi1>
    %121 = vector.broadcast %cst_80 : f32 to vector<2x288xf32>
    %122 = arith.select %120, %115, %121 : vector<2x288xi1>, vector<2x288xf32>
    %cst_81 = arith.constant dense<0.000000e+00> : vector<2xf32>
    %123 = vector.multi_reduction <add>, %122, %cst_81 [1] : vector<2x288xf32> to vector<2xf32>
    %124 = vector.shape_cast %123 : vector<2xf32> to vector<2x1xf32>
    %125 = arith.addf %90, %124 : vector<2x1xf32>
    %126 = arith.mulf %122, %122 : vector<2x288xf32>
    %cst_82 = arith.constant dense<0.000000e+00> : vector<2xf32>
    %127 = vector.multi_reduction <add>, %126, %cst_82 [1] : vector<2x288xf32> to vector<2xf32>
    %128 = vector.shape_cast %127 : vector<2xf32> to vector<2x1xf32>
    %129 = arith.addf %94, %128 : vector<2x1xf32>
    %cst_83 = arith.constant 0.000000e+00 : f32
    %130 = vector.broadcast %cst_83 : f32 to vector<2x288xf32>
    %c0_84 = arith.constant 0 : index
    %c0_85 = arith.constant 0 : index
    %c38 = arith.constant 38 : index
    %131 = vector.load %arg1[%c0_84, %c0_85, %c38] : memref<1x4x342xf32, #tpu.memory_space<vmem>>, vector<1x4x288xf32>
    %132 = vector.shape_cast %131 : vector<1x4x288xf32> to vector<4x288xf32>
    %c12 = arith.constant 12 : index
    %c0_86 = arith.constant 0 : index
    %c0_87 = arith.constant 0 : index
    %133 = vector.load %arg2[%c12, %c0_86, %c0_87] : memref<16x2x4xf32, #tpu.memory_space<vmem>>, vector<1x2x4xf32>
    %134 = vector.shape_cast %133 : vector<1x2x4xf32> to vector<2x4xf32>
    %cst_88 = arith.constant dense<0.000000e+00> : vector<2x288xf32>
    %135 = tpu.matmul %134, %132, %cst_88 {dimension_numbers = #tpu.dot_dimension_numbers<[1], [0], [0], [1], [0, 0, 1, 1], [], []>} : vector<2x4xf32>, vector<4x288xf32>, vector<2x288xf32> -> vector<2x288xf32>
    %136 = arith.addf %130, %135 : vector<2x288xf32>
    %c13 = arith.constant 13 : index
    %c0_89 = arith.constant 0 : index
    %c0_90 = arith.constant 0 : index
    %137 = vector.load %arg2[%c13, %c0_89, %c0_90] : memref<16x2x4xf32, #tpu.memory_space<vmem>>, vector<1x2x4xf32>
    %138 = vector.shape_cast %137 : vector<1x2x4xf32> to vector<2x4xf32>
    %cst_91 = arith.constant dense<0.000000e+00> : vector<2x288xf32>
    %139 = tpu.matmul %138, %97, %cst_91 {dimension_numbers = #tpu.dot_dimension_numbers<[1], [0], [0], [1], [0, 0, 1, 1], [], []>} : vector<2x4xf32>, vector<4x288xf32>, vector<2x288xf32> -> vector<2x288xf32>
    %140 = arith.addf %136, %139 : vector<2x288xf32>
    %c14 = arith.constant 14 : index
    %c0_92 = arith.constant 0 : index
    %c0_93 = arith.constant 0 : index
    %141 = vector.load %arg2[%c14, %c0_92, %c0_93] : memref<16x2x4xf32, #tpu.memory_space<vmem>>, vector<1x2x4xf32>
    %142 = vector.shape_cast %141 : vector<1x2x4xf32> to vector<2x4xf32>
    %cst_94 = arith.constant dense<0.000000e+00> : vector<2x288xf32>
    %143 = tpu.matmul %142, %62, %cst_94 {dimension_numbers = #tpu.dot_dimension_numbers<[1], [0], [0], [1], [0, 0, 1, 1], [], []>} : vector<2x4xf32>, vector<4x288xf32>, vector<2x288xf32> -> vector<2x288xf32>
    %144 = arith.addf %140, %143 : vector<2x288xf32>
    %c15 = arith.constant 15 : index
    %c0_95 = arith.constant 0 : index
    %c0_96 = arith.constant 0 : index
    %145 = vector.load %arg2[%c15, %c0_95, %c0_96] : memref<16x2x4xf32, #tpu.memory_space<vmem>>, vector<1x2x4xf32>
    %146 = vector.shape_cast %145 : vector<1x2x4xf32> to vector<2x4xf32>
    %cst_97 = arith.constant dense<0.000000e+00> : vector<2x288xf32>
    %147 = tpu.matmul %146, %23, %cst_97 {dimension_numbers = #tpu.dot_dimension_numbers<[1], [0], [0], [1], [0, 0, 1, 1], [], []>} : vector<2x4xf32>, vector<4x288xf32>, vector<2x288xf32> -> vector<2x288xf32>
    %148 = arith.addf %144, %147 : vector<2x288xf32>
    %c0_98 = arith.constant 0 : index
    %c3_99 = arith.constant 3 : index
    %c0_100 = arith.constant 0 : index
    %c0_101 = arith.constant 0 : index
    %149 = vector.load %arg3[%c0_98, %c3_99, %c0_100, %c0_101] : memref<1x4x2x288xf32, #tpu.memory_space<vmem>>, vector<1x1x2x288xf32>
    %150 = vector.shape_cast %149 : vector<1x1x2x288xf32> to vector<2x288xf32>
    %151 = vector.shape_cast %148 : vector<2x288xf32> to vector<1x1x2x288xf32>
    tpu.vector_store %arg3[%c0_98, %c3_99, %c0_100, %c0_101], %151 {strides = array<i32>} : memref<1x4x2x288xf32, #tpu.memory_space<vmem>>, vector<1x1x2x288xf32>,
    %cst_102 = arith.constant 0.000000e+00 : f32
    %152 = vector.shape_cast %18 : vector<1x288xi1> to vector<1x288xi1>
    %153 = vector.broadcast %152 : vector<1x288xi1> to vector<2x288xi1>
    %154 = vector.broadcast %cst_102 : f32 to vector<2x288xf32>
    %155 = arith.select %153, %148, %154 : vector<2x288xi1>, vector<2x288xf32>
    %cst_103 = arith.constant dense<0.000000e+00> : vector<2xf32>
    %156 = vector.multi_reduction <add>, %155, %cst_103 [1] : vector<2x288xf32> to vector<2xf32>
    %157 = vector.shape_cast %156 : vector<2xf32> to vector<2x1xf32>
    %158 = arith.addf %125, %157 : vector<2x1xf32>
    %159 = arith.mulf %155, %155 : vector<2x288xf32>
    %cst_104 = arith.constant dense<0.000000e+00> : vector<2xf32>
    %160 = vector.multi_reduction <add>, %159, %cst_104 [1] : vector<2x288xf32> to vector<2xf32>
    %161 = vector.shape_cast %160 : vector<2xf32> to vector<2x1xf32>
    %162 = arith.addf %129, %161 : vector<2x1xf32>
    %c0_105 = arith.constant 0 : index
    %c0_106 = arith.constant 0 : index
    %c0_107 = arith.constant 0 : index
    %163 = vector.load %arg4[%c0_105, %c0_106, %c0_107] : memref<1x2x2xf32, #tpu.memory_space<vmem>>, vector<1x2x1xf32>
    %164 = vector.shape_cast %163 : vector<1x2x1xf32> to vector<2x1xf32>
    %165 = vector.shape_cast %158 : vector<2x1xf32> to vector<1x2x1xf32>
    tpu.vector_store %arg4[%c0_105, %c0_106, %c0_107], %165 {strides = array<i32>} : memref<1x2x2xf32, #tpu.memory_space<vmem>>, vector<1x2x1xf32>,
    %c0_108 = arith.constant 0 : index
    %c0_109 = arith.constant 0 : index
    %c1_110 = arith.constant 1 : index
    %166 = vector.load %arg4[%c0_108, %c0_109, %c1_110] : memref<1x2x2xf32, #tpu.memory_space<vmem>>, vector<1x2x1xf32>
    %167 = vector.shape_cast %166 : vector<1x2x1xf32> to vector<2x1xf32>
    %168 = vector.shape_cast %162 : vector<2x1xf32> to vector<1x2x1xf32>
    tpu.vector_store %arg4[%c0_108, %c0_109, %c1_110], %168 {strides = array<i32>} : memref<1x2x2xf32, #tpu.memory_space<vmem>>, vector<1x2x1xf32>,
    return
  }
  func.func @transform_0(%arg0: i32) -> (i32, i32, i32) {
    %c0_i32 = arith.constant 0 : i32
    %c0_i32_0 = arith.constant 0 : i32
    %c0_i32_1 = arith.constant 0 : i32
    return %arg0, %c0_i32, %c0_i32_0 : i32, i32, i32
  }
  func.func @transform_1(%arg0: i32) -> (i32, i32, i32) {
    %c0_i32 = arith.constant 0 : i32
    %c0_i32_0 = arith.constant 0 : i32
    %c0_i32_1 = arith.constant 0 : i32
    %c0_i32_2 = arith.constant 0 : i32
    return %c0_i32, %c0_i32_0, %c0_i32_1 : i32, i32, i32
  }
  func.func @transform_2(%arg0: i32) -> (i32, i32, i32, i32) {
    %c0_i32 = arith.constant 0 : i32
    %c0_i32_0 = arith.constant 0 : i32
    %c0_i32_1 = arith.constant 0 : i32
    %c0_i32_2 = arith.constant 0 : i32
    return %arg0, %c0_i32, %c0_i32_0, %c0_i32_1 : i32, i32, i32, i32
  }
  func.func @transform_3(%arg0: i32) -> (i32, i32, i32) {
    %c0_i32 = arith.constant 0 : i32
    %c0_i32_0 = arith.constant 0 : i32
    %c0_i32_1 = arith.constant 0 : i32
    return %arg0, %c0_i32, %c0_i32_0 : i32, i32, i32
  }
}

</mosaic_0001>

<llo_original>
// kernel: upsample_forward.1
$region0: #{upsample_forward.1}
  #allocation0 [shape = 'u32[]', space=smem, size = 0x4, offset = 0x4, fixed_abs, tag = 'smem constant byte address 0x4 - core index']
  #allocation1 [shape = 'u32[72,128]{1,0:T(1,128)}', space=vmem, size = 0x9000, scoped, tag = 'internal scratch']
  %s0 = inlined_call_operand.vmem [shape: f32[2,4,342], index: 0, kind: input, shape index: {}]
  %s1 = inlined_call_operand.vmem [shape: f32[16,2,4], index: 1, kind: input, shape index: {}]
  %s2 = inlined_call_operand.vmem [shape: f32[2,4,2,288], index: 2, kind: output, shape index: {0}]
  %s3 = inlined_call_operand.vmem [shape: f32[2,2,2], index: 3, kind: output, shape index: {1}]
  %4 = xla_tuple %s2, %s3
  %s5 = sld [smem:[#allocation0]]
  $region49: #{upsample_forward.1} parent=0
    _
  %s7 = ssub.s32 1, %s5
  %s8 = scalar_select 0, %s7, %s5
  loop: start=0, step=1, limit=4
  $region2: #{upsample_forward.1} parent=0 // loop_pre_header
    _
  $region3: #{upsample_forward.1} parent=0 // loop_header
    %s10 = sphi 0, %s14
    %p11 = scmp.ge.s32.totalorder %s10, 4
    %s20 = sphi 0, %s22
    %s23 = sphi 0, %s20
    %s24 = sphi 0, %s23
    %s40 = sphi 0, %s24
    %s44 = sphi 0, %s44
    %s46 = sphi 0, %s44
    %s47 = sphi 0, %s46
    %s61 = sphi 0, %s47
    %s67 = sphi 0, %s69
    %s70 = sphi 0, %s67
    %s71 = sphi 0, %s70
    %s87 = sphi 0, %s71
    %s93 = sphi 0, %s95
    %s96 = sphi 0, %s93
    %s97 = sphi 0, %s96
    %s113 = sphi 0, %s97
  $region4: #{upsample_forward.1} parent=0 // loop_header_branch
    %13 = sbr.rel (%p11) target = $region8
  $region5: #{upsample_forward.1} parent=0 // loop_body
    %s15 = ssub.s32 %s10, 1
    %s16 = ssub.s32 %s10, 2
    %s17 = sadd.s32 %s10, 1
    %s18 = ssub.s32 %s10, %s17
    %p19 = scmp.eq.s32.totalorder %s18, 0
    %s21 = sadd.s32 %s20, 1
    %s22 = scalar_select %p19, %s20, %s21
    %p25 = pneg %p19
    %p26 = scmp.eq.s32.totalorder %s10, 1
    %p27 = por %p25, %p26
    %p28 = scmp.ne.s32.totalorder %s20, %s23
    %p29 = scmp.eq.s32.totalorder %s10, 0
    %p30 = por %p28, %p29
    %p31 = scmp.ne.s32.totalorder %s20, %s23
    %p32 = scmp.eq.s32.totalorder %s15, 1
    %p33 = por %p31, %p32
    %p34 = scmp.ne.s32.totalorder %s23, %s24
    %p35 = scmp.eq.s32.totalorder %s15, 0
    %p36 = por %p34, %p35
    %p37 = scmp.ne.s32.totalorder %s23, %s24
    %p38 = scmp.eq.s32.totalorder %s16, 1
    %p39 = por %p37, %p38
    %p41 = scmp.ne.s32.totalorder %s24, %s40
    %p42 = scmp.eq.s32.totalorder %s16, 0
    %p43 = por %p41, %p42
    %s45 = sadd.s32 %s44, 1
    %p48 = scmp.eq.s32.totalorder %s10, 1
    %p49 = scmp.ne.s32.totalorder %s44, %s46
    %p50 = scmp.eq.s32.totalorder %s10, 0
    %p51 = por %p49, %p50
    %p52 = scmp.ne.s32.totalorder %s44, %s46
    %p53 = scmp.eq.s32.totalorder %s15, 1
    %p54 = por %p52, %p53
    %p55 = scmp.ne.s32.totalorder %s46, %s47
    %p56 = scmp.eq.s32.totalorder %s15, 0
    %p57 = por %p55, %p56
    %p58 = scmp.ne.s32.totalorder %s46, %s47
    %p59 = scmp.eq.s32.totalorder %s16, 1
    %p60 = por %p58, %p59
    %p62 = scmp.ne.s32.totalorder %s47, %s61
    %p63 = scmp.eq.s32.totalorder %s16, 0
    %p64 = por %p62, %p63
    %s65 = ssub.s32 %s10, %s17
    %p66 = scmp.eq.s32.totalorder %s65, 0
    %s68 = sadd.s32 %s67, 1
    %s69 = scalar_select %p66, %s67, %s68
    %p72 = pneg %p66
    %p73 = scmp.eq.s32.totalorder %s10, 1
    %p74 = por %p72, %p73
    %p75 = scmp.ne.s32.totalorder %s67, %s70
    %p76 = scmp.eq.s32.totalorder %s10, 0
    %p77 = por %p75, %p76
    %p78 = scmp.ne.s32.totalorder %s67, %s70
    %p79 = scmp.eq.s32.totalorder %s15, 1
    %p80 = por %p78, %p79
    %p81 = scmp.ne.s32.totalorder %s70, %s71
    %p82 = scmp.eq.s32.totalorder %s15, 0
    %p83 = por %p81, %p82
    %p84 = scmp.ne.s32.totalorder %s70, %s71
    %p85 = scmp.eq.s32.totalorder %s16, 1
    %p86 = por %p84, %p85
    %p88 = scmp.ne.s32.totalorder %s71, %s87
    %p89 = scmp.eq.s32.totalorder %s16, 0
    %p90 = por %p88, %p89
    %s91 = ssub.s32 %s10, %s17
    %p92 = scmp.eq.s32.totalorder %s91, 0
    %s94 = sadd.s32 %s93, 1
    %s95 = scalar_select %p92, %s93, %s94
    %p98 = pneg %p92
    %p99 = scmp.eq.s32.totalorder %s10, 1
    %p100 = por %p98, %p99
    %p101 = scmp.ne.s32.totalorder %s93, %s96
    %p102 = scmp.eq.s32.totalorder %s10, 0
    %p103 = por %p101, %p102
    %p104 = scmp.ne.s32.totalorder %s93, %s96
    %p105 = scmp.eq.s32.totalorder %s15, 1
    %p106 = por %p104, %p105
    %p107 = scmp.ne.s32.totalorder %s96, %s97
    %p108 = scmp.eq.s32.totalorder %s15, 0
    %p109 = por %p107, %p108
    %p110 = scmp.ne.s32.totalorder %s96, %s97
    %p111 = scmp.eq.s32.totalorder %s16, 1
    %p112 = por %p110, %p111
    %p114 = scmp.ne.s32.totalorder %s97, %s113
    %p115 = scmp.eq.s32.totalorder %s16, 0
    %p116 = por %p114, %p115
    %p117 = scmp.le.s32.totalorder 1, %s10
    %p118 = scmp.lt.s32.totalorder %s10, 3
    %p119 = pnand %p117, %p118
    %p120 = pneg %p119
    // Predicated region
    $region9: #{upsample_forward.1} parent=5 // pred_check
      _
    $region10: #{upsample_forward.1} parent=5 // pred_check_branch
      %122 = sbr.rel (%p119) target = $region12
    $region11: #{upsample_forward.1} parent=5 // pred_region
      %s123 = ssub.s32 %s10, 1
      // Predicated region
      $region13: #{upsample_forward.1} parent=11 // pred_check
        %p124 = pneg %p57
      $region14: #{upsample_forward.1} parent=11 // pred_check_branch
        %126 = sbr.rel (%p124) target = $region16
      $region15: #{upsample_forward.1} parent=11 // pred_region
        _
      $region16: #{upsample_forward.1} parent=11 // pred_fallthru
        _
    $region12: #{upsample_forward.1} parent=5 // pred_fallthru
      _
    %p127 = scmp.lt.s32.totalorder %s10, 2
    // Predicated region
    $region17: #{upsample_forward.1} parent=5 // pred_check
      %p128 = pneg %p127
    $region18: #{upsample_forward.1} parent=5 // pred_check_branch
      %130 = sbr.rel (%p128) target = $region20
    $region19: #{upsample_forward.1} parent=5 // pred_region
      // Predicated region
      $region21: #{upsample_forward.1} parent=19 // pred_check
        %p131 = pneg %p30
      $region22: #{upsample_forward.1} parent=19 // pred_check_branch
        %133 = sbr.rel (%p131) target = $region24
      $region23: #{upsample_forward.1} parent=19 // pred_region
        %p134 = scmp.lt.s32.totalorder %s10, 1
        %s135 = scalar_select %p134, %s10, 1
        %s136 = smul.addr %s135, 3
        %s137 = smul.addr %s136, 4
        %s138 = scalar_lea.vmem %s0, %s137
      $region24: #{upsample_forward.1} parent=19 // pred_fallthru
        _
    $region20: #{upsample_forward.1} parent=5 // pred_fallthru
      _
    %p139 = scmp.le.s32.totalorder 1, %s10
    %p140 = scmp.lt.s32.totalorder %s10, 3
    %p141 = pnand %p139, %p140
    %p142 = pneg %p141
    // Predicated region
    $region25: #{upsample_forward.1} parent=5 // pred_check
      _
    $region26: #{upsample_forward.1} parent=5 // pred_check_branch
      %144 = sbr.rel (%p141) target = $region28
    $region27: #{upsample_forward.1} parent=5 // pred_region
      %s145 = ssub.s32 %s10, 1
      %p146 = scmp.lt.s32.totalorder %s15, 1
      %s147 = scalar_select %p146, %s15, 1
      %s148 = smul.addr %s147, 3
      %s149 = smul.addr %s148, 4
      %s150 = scalar_lea.vmem %s0, %s149
      %p151 = pneg %p36
      %p152 = pneg %p33
      %p153 = pneg %p57
      %p154 = pneg %p54
      %p155 = pneg %p83
      %p156 = pneg %p80
      %p157 = scmp.lt.s32.totalorder %s15, 1
      %s158 = scalar_select %p157, %s15, 1
      %s159 = smul.addr %s158, 12
      %s160 = smul.addr %s159, 2
      %s161 = scalar_lea.vmem %s2, %s160
      %p162 = pneg %p109
      %p163 = pneg %p106
      %p164 = scmp.lt.s32.totalorder %s15, 1
      %s165 = scalar_select %p164, %s15, 1
      %s166 = smul.addr %s165, 2
      %s167 = scalar_lea.vmem %s3, %s166
      %p168 = scmp.lt.s32.totalorder %s15, 1
      %s169 = scalar_select %p168, %s15, 1
      %s170 = smul.addr %s169, 3
      %s171 = smul.addr %s170, 4
      %s172 = scalar_lea.vmem %s0, %s171
      %p173 = scmp.lt.s32.totalorder %s15, 1
      %s174 = scalar_select %p173, %s15, 1
      %s175 = smul.addr %s174, 12
      %s176 = smul.addr %s175, 2
      %s177 = scalar_lea.vmem %s2, %s176
      %p178 = scmp.lt.s32.totalorder %s15, 1
      %s179 = scalar_select %p178, %s15, 1
      %s180 = smul.addr %s179, 2
      %s181 = scalar_lea.vmem %s3, %s180
      %v182 = vlaneseq
      %v183 = vand.u32 %v182, 127
      %v184 = vadd.s32 %v183, 128
      %v185 = vadd.s32 %v183, 256
      %vm186 = vcmp.lt.s32.totalorder %v183, 0
      %v187 = vsub.s32 0, %v183
      %v188 = vsel %vm186, %v187, %v183
      %v189 = vand.u32 %v188, 65535
      %v190 = vshrl.u32 %v188, 16
      %v192 = vmul.u32 %v189, 14564
      %v193 = vmul.u32 %v189, 58254
      %v194 = vmul.u32 %v190, 14564
      %v195 = vmul.u32 %v190, 58254
      %v196 = vshll.u32 %v193, 16
      %v197 = vshrl.u32 %v193, 16
      %v198 = vshll.u32 %v194, 16
      %v199 = vshrl.u32 %v194, 16
      %vm200 = vc.u32 %v192, %v196
      %v201 = vsel %vm200, 1, 0
      %v202 = vadd.s32 %v192, %v196
      %v203 = vadd.s32 %v195, %v201
      %vm204 = vc.u32 %v202, %v198
      %v205 = vsel %vm204, 1, 0
      %v206 = vadd.s32 %v202, %v198
      %v207 = vadd.s32 %v203, %v205
      %v208 = vadd.s32 %v207, %v197
      %v209 = vadd.s32 %v208, %v199
      %v210 = vshrl.u32 %v209, 4
      %v211 = vmul.u32 %v210, 18
      %v212 = vsub.s32 %v188, %v211
      %v213 = vsub.s32 0, %v212
      %v214 = vsel %vm186, %v213, %v212
      %vm215 = vcmp.lt.s32.totalorder %v184, 0
      %v216 = vsub.s32 0, %v184
      %v217 = vsel %vm215, %v216, %v184
      %v218 = vand.u32 %v217, 65535
      %v219 = vshrl.u32 %v217, 16
      %v221 = vmul.u32 %v218, 14564
      %v222 = vmul.u32 %v218, 58254
      %v223 = vmul.u32 %v219, 14564
      %v224 = vmul.u32 %v219, 58254
      %v225 = vshll.u32 %v222, 16
      %v226 = vshrl.u32 %v222, 16
      %v227 = vshll.u32 %v223, 16
      %v228 = vshrl.u32 %v223, 16
      %vm229 = vc.u32 %v221, %v225
      %v230 = vsel %vm229, 1, 0
      %v231 = vadd.s32 %v221, %v225
      %v232 = vadd.s32 %v224, %v230
      %vm233 = vc.u32 %v231, %v227
      %v234 = vsel %vm233, 1, 0
      %v235 = vadd.s32 %v231, %v227
      %v236 = vadd.s32 %v232, %v234
      %v237 = vadd.s32 %v236, %v226
      %v238 = vadd.s32 %v237, %v228
      %v239 = vshrl.u32 %v238, 4
      %v240 = vmul.u32 %v239, 18
      %v241 = vsub.s32 %v217, %v240
      %v242 = vsub.s32 0, %v241
      %v243 = vsel %vm215, %v242, %v241
      %vm244 = vcmp.lt.s32.totalorder %v185, 0
      %v245 = vsub.s32 0, %v185
      %v246 = vsel %vm244, %v245, %v185
      %v247 = vand.u32 %v246, 65535
      %v248 = vshrl.u32 %v246, 16
      %v250 = vmul.u32 %v247, 14564
      %v251 = vmul.u32 %v247, 58254
      %v252 = vmul.u32 %v248, 14564
      %v253 = vmul.u32 %v248, 58254
      %v254 = vshll.u32 %v251, 16
      %v255 = vshrl.u32 %v251, 16
      %v256 = vshll.u32 %v252, 16
      %v257 = vshrl.u32 %v252, 16
      %vm258 = vc.u32 %v250, %v254
      %v259 = vsel %vm258, 1, 0
      %v260 = vadd.s32 %v250, %v254
      %v261 = vadd.s32 %v253, %v259
      %vm262 = vc.u32 %v260, %v256
      %v263 = vsel %vm262, 1, 0
      %v264 = vadd.s32 %v260, %v256
      %v265 = vadd.s32 %v261, %v263
      %v266 = vadd.s32 %v265, %v255
      %v267 = vadd.s32 %v266, %v257
      %v268 = vshrl.u32 %v267, 4
      %v269 = vmul.u32 %v268, 18
      %v270 = vsub.s32 %v246, %v269
      %v271 = vsub.s32 0, %v270
      %v272 = vsel %vm244, %v271, %v270
      %vm273 = vcmp.ne.s32.totalorder %v214, 0
      %vm274 = vcmp.ne.s32.totalorder %v243, 0
      %vm275 = vcmp.ne.s32.totalorder %v272, 0
      %vm276 = vcmp.lt.s32.totalorder %v214, 0
      %vm277 = vcmp.lt.s32.totalorder %v243, 0
      %vm278 = vcmp.lt.s32.totalorder %v272, 0
      %vm279 = vmand %vm276, %vm273
      %vm280 = vmand %vm277, %vm274
      %vm281 = vmand %vm278, %vm275
      %v282 = vadd.s32 %v214, 18
      %v283 = vadd.s32 %v243, 18
      %v284 = vadd.s32 %v272, 18
      %v285 = vsel %vm279, %v282, %v214
      %v286 = vsel %vm280, %v283, %v243
      %v287 = vsel %vm281, %v284, %v272
      %vm288 = vcmp.lt.s32.totalorder %v285, 16
      %vm289 = vcmp.lt.s32.totalorder %v286, 16
      %vm290 = vcmp.lt.s32.totalorder %v287, 16
      %v291 = vld [vmem:[%s172] sm:$0xff]
      %v292 = vld [vmem:[%s172 + $0x8] sm:$0xf]
      %v293 = vld [vmem:[%s1] sm:$0x3]
      %s294 = scalar_lea.vmem %s1, 2
      %v295 = vld [vmem:[%s294] sm:$0x3]
      %298 = vst [vmem:[#allocation1] ss:$2 sm:$0xff] %v291
      %s299 = scalar_lea.vmem [#allocation1], 16
      %300 = vst [vmem:[%s299] ss:$2 sm:$0xff] %v292
      %v301 = vld.sshfl [vmem:[#allocation1] sm:$0xff pattern:$0x75316420]
      %v302 = vld.sshfl [vmem:[#allocation1 + $0x8] sm:$0xff pattern:$0x75316420]
      %v303 = vld.sshfl [vmem:[#allocation1 + $0x10] sm:$0xff pattern:$0x75316420]
      %304 = vrot.lane.b32.xlu0 %v301, 110
      %v305 = vpop.permute.xlu0 %304
      %306 = vrot.lane.b32.xlu0 %v302, 110
      %v307 = vpop.permute.xlu0 %306
      %308 = vrot.lane.b32.xlu0 %v303, 110
      %v309 = vpop.permute.xlu0 %308
      %vm310 = vcmask 900096
      %v311 = vsel %vm310, %v305, %v307
      %v312 = vsel %vm310, %v307, %v309
      %vm313 = vcmask 31744
      %v315 = vsel %vm313, %v295, 0
      %vm317 = vcmask 1043456
      %v318 = vsel %vm317, %v311, 0
      %v320 = vsel %vm317, %v312, 0
      %v322 = vsel %vm317, %v309, 0
      %324 = vmatpush.msra.mxu0 0.0
      %325 = vmatpush.msra.mxu0 0.0
      %326 = vmatpush.msra.mxu0 0.0
      %327 = vmatpush.msra.mxu0 0.0
      %328 = vmatpush.msra.mxu0 0.0
      %329 = vmatpush.msra.mxu0 0.0
      %330 = vmatpush.msra.mxu0 0.0
      %331 = vmatpush.msra.mxu0 0.0
      %332 = vmatpush.msra.mxu0 0.0
      %333 = vmatpush.msra.mxu0 0.0
      %334 = vmatpush.msra.mxu0 0.0
      %335 = vmatpush.msra.mxu0 0.0
      %336 = vmatpush.msra.mxu0 0.0
      %337 = vmatpush.msra.mxu0 0.0
      %338 = vmatpush.msra.mxu0 0.0
      %339 = vmatpush.msra.mxu0 %v318
      %340 = vmatmul.f32.gmra.mxu0 %v315
      %v341 = vpop.f32.mrf.mxu0
      %v342 = vadd.f32 0.0, %v341
      %343 = vdwg.mxu0
      %344 = vmatpush.msra.mxu0 0.0
      %345 = vmatpush.msra.mxu0 0.0
      %346 = vmatpush.msra.mxu0 0.0
      %347 = vmatpush.msra.mxu0 0.0
      %348 = vmatpush.msra.mxu0 0.0
      %349 = vmatpush.msra.mxu0 0.0
      %350 = vmatpush.msra.mxu0 0.0
      %351 = vmatpush.msra.mxu0 0.0
      %352 = vmatpush.msra.mxu0 0.0
      %353 = vmatpush.msra.mxu0 0.0
      %354 = vmatpush.msra.mxu0 0.0
      %355 = vmatpush.msra.mxu0 0.0
      %356 = vmatpush.msra.mxu0 0.0
      %357 = vmatpush.msra.mxu0 0.0
      %358 = vmatpush.msra.mxu0 0.0
      %359 = vmatpush.msra.mxu0 %v320
      %360 = vmatmul.f32.gmra.mxu0 %v315
      %v361 = vpop.f32.mrf.mxu0
      %v362 = vadd.f32 0.0, %v361
      %363 = vdwg.mxu0
      %364 = vmatpush.msra.mxu0 0.0
      %365 = vmatpush.msra.mxu0 0.0
      %366 = vmatpush.msra.mxu0 0.0
      %367 = vmatpush.msra.mxu0 0.0
      %368 = vmatpush.msra.mxu0 0.0
      %369 = vmatpush.msra.mxu0 0.0
      %370 = vmatpush.msra.mxu0 0.0
      %371 = vmatpush.msra.mxu0 0.0
      %372 = vmatpush.msra.mxu0 0.0
      %373 = vmatpush.msra.mxu0 0.0
      %374 = vmatpush.msra.mxu0 0.0
      %375 = vmatpush.msra.mxu0 0.0
      %376 = vmatpush.msra.mxu0 0.0
      %377 = vmatpush.msra.mxu0 0.0
      %378 = vmatpush.msra.mxu0 0.0
      %379 = vmatpush.msra.mxu0 %v322
      %380 = vmatmul.f32.gmra.mxu0 %v315
      %v381 = vpop.f32.mrf.mxu0
      %v382 = vadd.f32 0.0, %v381
      %383 = vdwg.mxu0
      %384 = vst [vmem:[#allocation1] ss:$2 sm:$0xff] %v291
      %s385 = scalar_lea.vmem [#allocation1], 16
      %386 = vst [vmem:[%s385] ss:$2 sm:$0xff] %v292
      %v387 = vld.sshfl [vmem:[#allocation1] sm:$0xff pattern:$0x75316420]
      %v388 = vld.sshfl [vmem:[#allocation1 + $0x8] sm:$0xff pattern:$0x75316420]
      %v389 = vld.sshfl [vmem:[#allocation1 + $0x10] sm:$0xff pattern:$0x75316420]
      %390 = vrot.lane.b32.xlu0 %v387, 109
      %v391 = vpop.permute.xlu0 %390
      %392 = vrot.lane.b32.xlu0 %v388, 109
      %v393 = vpop.permute.xlu0 %392
      %394 = vrot.lane.b32.xlu0 %v389, 109
      %v395 = vpop.permute.xlu0 %394
      %vm396 = vcmask 891904
      %v397 = vsel %vm396, %v391, %v393
      %v398 = vsel %vm396, %v393, %v395
      %v400 = vsel %vm313, %v293, 0
      %v402 = vsel %vm317, %v397, 0
      %v404 = vsel %vm317, %v398, 0
      %v406 = vsel %vm317, %v395, 0
      %408 = vmatpush.msra.mxu0 0.0
      %409 = vmatpush.msra.mxu0 0.0
      %410 = vmatpush.msra.mxu0 0.0
      %411 = vmatpush.msra.mxu0 0.0
      %412 = vmatpush.msra.mxu0 0.0
      %413 = vmatpush.msra.mxu0 0.0
      %414 = vmatpush.msra.mxu0 0.0
      %415 = vmatpush.msra.mxu0 0.0
      %416 = vmatpush.msra.mxu0 0.0
      %417 = vmatpush.msra.mxu0 0.0
      %418 = vmatpush.msra.mxu0 0.0
      %419 = vmatpush.msra.mxu0 0.0
      %420 = vmatpush.msra.mxu0 0.0
      %421 = vmatpush.msra.mxu0 0.0
      %422 = vmatpush.msra.mxu0 0.0
      %423 = vmatpush.msra.mxu0 %v402
      %424 = vmatmul.f32.gmra.mxu0 %v400
      %v425 = vpop.f32.mrf.mxu0
      %v426 = vadd.f32 %v342, %v425
      %427 = vdwg.mxu0
      %428 = vmatpush.msra.mxu0 0.0
      %429 = vmatpush.msra.mxu0 0.0
      %430 = vmatpush.msra.mxu0 0.0
      %431 = vmatpush.msra.mxu0 0.0
      %432 = vmatpush.msra.mxu0 0.0
      %433 = vmatpush.msra.mxu0 0.0
      %434 = vmatpush.msra.mxu0 0.0
      %435 = vmatpush.msra.mxu0 0.0
      %436 = vmatpush.msra.mxu0 0.0
      %437 = vmatpush.msra.mxu0 0.0
      %438 = vmatpush.msra.mxu0 0.0
      %439 = vmatpush.msra.mxu0 0.0
      %440 = vmatpush.msra.mxu0 0.0
      %441 = vmatpush.msra.mxu0 0.0
      %442 = vmatpush.msra.mxu0 0.0
      %443 = vmatpush.msra.mxu0 %v404
      %444 = vmatmul.f32.gmra.mxu0 %v400
      %v445 = vpop.f32.mrf.mxu0
      %v446 = vadd.f32 %v362, %v445
      %447 = vdwg.mxu0
      %448 = vmatpush.msra.mxu0 0.0
      %449 = vmatpush.msra.mxu0 0.0
      %450 = vmatpush.msra.mxu0 0.0
      %451 = vmatpush.msra.mxu0 0.0
      %452 = vmatpush.msra.mxu0 0.0
      %453 = vmatpush.msra.mxu0 0.0
      %454 = vmatpush.msra.mxu0 0.0
      %455 = vmatpush.msra.mxu0 0.0
      %456 = vmatpush.msra.mxu0 0.0
      %457 = vmatpush.msra.mxu0 0.0
      %458 = vmatpush.msra.mxu0 0.0
      %459 = vmatpush.msra.mxu0 0.0
      %460 = vmatpush.msra.mxu0 0.0
      %461 = vmatpush.msra.mxu0 0.0
      %462 = vmatpush.msra.mxu0 0.0
      %463 = vmatpush.msra.mxu0 %v406
      %464 = vmatmul.f32.gmra.mxu0 %v400
      %v465 = vpop.f32.mrf.mxu0
      %v466 = vadd.f32 %v382, %v465
      %467 = vdwg.mxu0
      %v468 = vld [vmem:[%s172] sm:$0xff]
      %v469 = vld [vmem:[%s172 + $0x8] sm:$0xf]
      %s470 = scalar_lea.vmem %s1, 4
      %v471 = vld [vmem:[%s470] sm:$0x3]
      %474 = vst [vmem:[#allocation1] ss:$2 sm:$0xff] %v468
      %s475 = scalar_lea.vmem [#allocation1], 16
      %476 = vst [vmem:[%s475] ss:$2 sm:$0xff] %v469
      %v477 = vld.sshfl [vmem:[#allocation1] sm:$0xff pattern:$0x75316420]
      %v478 = vld.sshfl [vmem:[#allocation1 + $0x8] sm:$0xff pattern:$0x75316420]
      %v479 = vld.sshfl [vmem:[#allocation1 + $0x10] sm:$0xff pattern:$0x75316420]
      %480 = vrot.lane.b32.xlu0 %v477, 127
      %v481 = vpop.permute.xlu0 %480
      %482 = vrot.lane.b32.xlu0 %v478, 127
      %v483 = vpop.permute.xlu0 %482
      %484 = vrot.lane.b32.xlu0 %v479, 127
      %v485 = vpop.permute.xlu0 %484
      %vm486 = vcmask 1039360
      %v487 = vsel %vm486, %v481, %v483
      %v488 = vsel %vm486, %v483, %v485
      %v490 = vsel %vm313, %v471, 0
      %v492 = vsel %vm317, %v487, 0
      %v494 = vsel %vm317, %v488, 0
      %v496 = vsel %vm317, %v485, 0
      %498 = vmatpush.msra.mxu0 0.0
      %499 = vmatpush.msra.mxu0 0.0
      %500 = vmatpush.msra.mxu0 0.0
      %501 = vmatpush.msra.mxu0 0.0
      %502 = vmatpush.msra.mxu0 0.0
      %503 = vmatpush.msra.mxu0 0.0
      %504 = vmatpush.msra.mxu0 0.0
      %505 = vmatpush.msra.mxu0 0.0
      %506 = vmatpush.msra.mxu0 0.0
      %507 = vmatpush.msra.mxu0 0.0
      %508 = vmatpush.msra.mxu0 0.0
      %509 = vmatpush.msra.mxu0 0.0
      %510 = vmatpush.msra.mxu0 0.0
      %511 = vmatpush.msra.mxu0 0.0
      %512 = vmatpush.msra.mxu0 0.0
      %513 = vmatpush.msra.mxu0 %v492
      %514 = vmatmul.f32.gmra.mxu0 %v490
      %v515 = vpop.f32.mrf.mxu0
      %v516 = vadd.f32 0.0, %v515
      %517 = vdwg.mxu0
      %518 = vmatpush.msra.mxu0 0.0
      %519 = vmatpush.msra.mxu0 0.0
      %520 = vmatpush.msra.mxu0 0.0
      %521 = vmatpush.msra.mxu0 0.0
      %522 = vmatpush.msra.mxu0 0.0
      %523 = vmatpush.msra.mxu0 0.0
      %524 = vmatpush.msra.mxu0 0.0
      %525 = vmatpush.msra.mxu0 0.0
      %526 = vmatpush.msra.mxu0 0.0
      %527 = vmatpush.msra.mxu0 0.0
      %528 = vmatpush.msra.mxu0 0.0
      %529 = vmatpush.msra.mxu0 0.0
      %530 = vmatpush.msra.mxu0 0.0
      %531 = vmatpush.msra.mxu0 0.0
      %532 = vmatpush.msra.mxu0 0.0
      %533 = vmatpush.msra.mxu0 %v494
      %534 = vmatmul.f32.gmra.mxu0 %v490
      %v535 = vpop.f32.mrf.mxu0
      %v536 = vadd.f32 0.0, %v535
      %537 = vdwg.mxu0
      %538 = vmatpush.msra.mxu0 0.0
      %539 = vmatpush.msra.mxu0 0.0
      %540 = vmatpush.msra.mxu0 0.0
      %541 = vmatpush.msra.mxu0 0.0
      %542 = vmatpush.msra.mxu0 0.0
      %543 = vmatpush.msra.mxu0 0.0
      %544 = vmatpush.msra.mxu0 0.0
      %545 = vmatpush.msra.mxu0 0.0
      %546 = vmatpush.msra.mxu0 0.0
      %547 = vmatpush.msra.mxu0 0.0
      %548 = vmatpush.msra.mxu0 0.0
      %549 = vmatpush.msra.mxu0 0.0
      %550 = vmatpush.msra.mxu0 0.0
      %551 = vmatpush.msra.mxu0 0.0
      %552 = vmatpush.msra.mxu0 0.0
      %553 = vmatpush.msra.mxu0 %v496
      %554 = vmatmul.f32.gmra.mxu0 %v490
      %v555 = vpop.f32.mrf.mxu0
      %v556 = vadd.f32 0.0, %v555
      %557 = vdwg.mxu0
      %v558 = vadd.f32 %v426, %v516
      %v559 = vadd.f32 %v446, %v536
      %v560 = vadd.f32 %v466, %v556
      %v561 = vld [vmem:[%s172] sm:$0xff]
      %v562 = vld [vmem:[%s172 + $0x8] sm:$0xf]
      %s563 = scalar_lea.vmem %s1, 6
      %v564 = vld [vmem:[%s563] sm:$0x3]
      %567 = vst [vmem:[#allocation1] ss:$2 sm:$0xff] %v561
      %s568 = scalar_lea.vmem [#allocation1], 16
      %569 = vst [vmem:[%s568] ss:$2 sm:$0xff] %v562
      %v570 = vld.sshfl [vmem:[#allocation1] sm:$0xff pattern:$0x75316420]
      %v571 = vld.sshfl [vmem:[#allocation1 + $0x8] sm:$0xff pattern:$0x75316420]
      %v572 = vld.sshfl [vmem:[#allocation1 + $0x10] sm:$0xff pattern:$0x75316420]
      %v574 = vsel %vm313, %v564, 0
      %v576 = vsel %vm317, %v570, 0
      %v578 = vsel %vm317, %v571, 0
      %v580 = vsel %vm317, %v572, 0
      %582 = vmatpush.msra.mxu0 0.0
      %583 = vmatpush.msra.mxu0 0.0
      %584 = vmatpush.msra.mxu0 0.0
      %585 = vmatpush.msra.mxu0 0.0
      %586 = vmatpush.msra.mxu0 0.0
      %587 = vmatpush.msra.mxu0 0.0
      %588 = vmatpush.msra.mxu0 0.0
      %589 = vmatpush.msra.mxu0 0.0
      %590 = vmatpush.msra.mxu0 0.0
      %591 = vmatpush.msra.mxu0 0.0
      %592 = vmatpush.msra.mxu0 0.0
      %593 = vmatpush.msra.mxu0 0.0
      %594 = vmatpush.msra.mxu0 0.0
      %595 = vmatpush.msra.mxu0 0.0
      %596 = vmatpush.msra.mxu0 0.0
      %597 = vmatpush.msra.mxu0 %v576
      %598 = vmatmul.f32.gmra.mxu0 %v574
      %v599 = vpop.f32.mrf.mxu0
      %v600 = vadd.f32 0.0, %v599
      %601 = vdwg.mxu0
      %602 = vmatpush.msra.mxu0 0.0
      %603 = vmatpush.msra.mxu0 0.0
      %604 = vmatpush.msra.mxu0 0.0
      %605 = vmatpush.msra.mxu0 0.0
      %606 = vmatpush.msra.mxu0 0.0
      %607 = vmatpush.msra.mxu0 0.0
      %608 = vmatpush.msra.mxu0 0.0
      %609 = vmatpush.msra.mxu0 0.0
      %610 = vmatpush.msra.mxu0 0.0
      %611 = vmatpush.msra.mxu0 0.0
      %612 = vmatpush.msra.mxu0 0.0
      %613 = vmatpush.msra.mxu0 0.0
      %614 = vmatpush.msra.mxu0 0.0
      %615 = vmatpush.msra.mxu0 0.0
      %616 = vmatpush.msra.mxu0 0.0
      %617 = vmatpush.msra.mxu0 %v578
      %618 = vmatmul.f32.gmra.mxu0 %v574
      %v619 = vpop.f32.mrf.mxu0
      %v620 = vadd.f32 0.0, %v619
      %621 = vdwg.mxu0
      %622 = vmatpush.msra.mxu0 0.0
      %623 = vmatpush.msra.mxu0 0.0
      %624 = vmatpush.msra.mxu0 0.0
      %625 = vmatpush.msra.mxu0 0.0
      %626 = vmatpush.msra.mxu0 0.0
      %627 = vmatpush.msra.mxu0 0.0
      %628 = vmatpush.msra.mxu0 0.0
      %629 = vmatpush.msra.mxu0 0.0
      %630 = vmatpush.msra.mxu0 0.0
      %631 = vmatpush.msra.mxu0 0.0
      %632 = vmatpush.msra.mxu0 0.0
      %633 = vmatpush.msra.mxu0 0.0
      %634 = vmatpush.msra.mxu0 0.0
      %635 = vmatpush.msra.mxu0 0.0
      %636 = vmatpush.msra.mxu0 0.0
      %637 = vmatpush.msra.mxu0 %v580
      %638 = vmatmul.f32.gmra.mxu0 %v574
      %v639 = vpop.f32.mrf.mxu0
      %v640 = vadd.f32 0.0, %v639
      %641 = vdwg.mxu0
      %v642 = vadd.f32 %v558, %v600
      %v643 = vadd.f32 %v559, %v620
      %v644 = vadd.f32 %v560, %v640
      %v648 = vrot.slane %v643, 6
      %v649 = vrot.slane %v644, 4
      %vm650 = vcmask 1041408
      %v651 = vsel %vm650, %v642, %v648
      %v652 = vsel %vm317, %v651, %v649
      %vm654 = vcmask 1043458
      %vm655 = vmor %vm654, %vm650
      %vm656 = vcmask 259076
      %vm657 = vmor %vm656, %vm655
      %658 = vst.msk [vmem:[%s177] sm:$0x3f] %vm657, %v652
      %v659 = vsel %vm288, 1, 0
      %v660 = vsel %vm289, 1, 0
      %v661 = vsel %vm290, 1, 0
      %vm662 = vcmp.eq.s32.totalorder %v659, 1
      %vm663 = vcmp.eq.s32.totalorder %v660, 1
      %vm664 = vcmp.eq.s32.totalorder %v661, 1
      %v665 = vsel %vm662, %v642, 0.0
      %v666 = vsel %vm663, %v643, 0.0
      %v667 = vsel %vm664, %v644, 0.0
      %v668 = vsel %vm650, %v665, 0.0
      %v669 = vsel %vm650, %v666, 0.0
      %v670 = vadd.f32 %v668, %v669
      %vm671 = vcmask 254976
      %v672 = vsel %vm671, %v667, 0.0
      %v673 = vadd.f32 %v670, %v672
      %674 = vadd.xlane.f32.xlu0 %v673
      %v675 = vpop.xlane.xlu0 %674
      %v676 = vadd.f32 %v675, 0.0
      %v677 = vmul.f32 %v665, %v665
      %v678 = vmul.f32 %v666, %v666
      %v679 = vmul.f32 %v667, %v667
      %v680 = vsel %vm650, %v677, 0.0
      %v681 = vsel %vm650, %v678, 0.0
      %v682 = vadd.f32 %v680, %v681
      %v683 = vsel %vm671, %v679, 0.0
      %v684 = vadd.f32 %v682, %v683
      %685 = vadd.xlane.f32.xlu0 %v684
      %v686 = vpop.xlane.xlu0 %685
      %v687 = vadd.f32 %v686, 0.0
      %v688 = vld [vmem:[%s172] sm:$0xff]
      %v689 = vld [vmem:[%s172 + $0x8] sm:$0xf]
      %s690 = scalar_lea.vmem %s1, 8
      %v691 = vld [vmem:[%s690] sm:$0x3]
      %s692 = scalar_lea.vmem %s1, 10
      %v693 = vld [vmem:[%s692] sm:$0x3]
      %694 = vst [vmem:[#allocation1] ss:$2 sm:$0xff] %v291
      %s695 = scalar_lea.vmem [#allocation1], 16
      %696 = vst [vmem:[%s695] ss:$2 sm:$0xff] %v292
      %v697 = vld.sshfl [vmem:[#allocation1] sm:$0xff pattern:$0x75316420]
      %v698 = vld.sshfl [vmem:[#allocation1 + $0x8] sm:$0xff pattern:$0x75316420]
      %v699 = vld.sshfl [vmem:[#allocation1 + $0x10] sm:$0xff pattern:$0x75316420]
      %700 = vrot.lane.b32.xlu0 %v697, 109
      %v701 = vpop.permute.xlu0 %700
      %702 = vrot.lane.b32.xlu0 %v698, 109
      %v703 = vpop.permute.xlu0 %702
      %704 = vrot.lane.b32.xlu0 %v699, 109
      %v705 = vpop.permute.xlu0 %704
      %v706 = vsel %vm396, %v701, %v703
      %v707 = vsel %vm396, %v703, %v705
      %v709 = vsel %vm313, %v693, 0
      %v711 = vsel %vm317, %v706, 0
      %v713 = vsel %vm317, %v707, 0
      %v715 = vsel %vm317, %v705, 0
      %717 = vmatpush.msra.mxu0 0.0
      %718 = vmatpush.msra.mxu0 0.0
      %719 = vmatpush.msra.mxu0 0.0
      %720 = vmatpush.msra.mxu0 0.0
      %721 = vmatpush.msra.mxu0 0.0
      %722 = vmatpush.msra.mxu0 0.0
      %723 = vmatpush.msra.mxu0 0.0
      %724 = vmatpush.msra.mxu0 0.0
      %725 = vmatpush.msra.mxu0 0.0
      %726 = vmatpush.msra.mxu0 0.0
      %727 = vmatpush.msra.mxu0 0.0
      %728 = vmatpush.msra.mxu0 0.0
      %729 = vmatpush.msra.mxu0 0.0
      %730 = vmatpush.msra.mxu0 0.0
      %731 = vmatpush.msra.mxu0 0.0
      %732 = vmatpush.msra.mxu0 %v711
      %733 = vmatmul.f32.gmra.mxu0 %v709
      %v734 = vpop.f32.mrf.mxu0
      %v735 = vadd.f32 0.0, %v734
      %736 = vdwg.mxu0
      %737 = vmatpush.msra.mxu0 0.0
      %738 = vmatpush.msra.mxu0 0.0
      %739 = vmatpush.msra.mxu0 0.0
      %740 = vmatpush.msra.mxu0 0.0
      %741 = vmatpush.msra.mxu0 0.0
      %742 = vmatpush.msra.mxu0 0.0
      %743 = vmatpush.msra.mxu0 0.0
      %744 = vmatpush.msra.mxu0 0.0
      %745 = vmatpush.msra.mxu0 0.0
      %746 = vmatpush.msra.mxu0 0.0
      %747 = vmatpush.msra.mxu0 0.0
      %748 = vmatpush.msra.mxu0 0.0
      %749 = vmatpush.msra.mxu0 0.0
      %750 = vmatpush.msra.mxu0 0.0
      %751 = vmatpush.msra.mxu0 0.0
      %752 = vmatpush.msra.mxu0 %v713
      %753 = vmatmul.f32.gmra.mxu0 %v709
      %v754 = vpop.f32.mrf.mxu0
      %v755 = vadd.f32 0.0, %v754
      %756 = vdwg.mxu0
      %757 = vmatpush.msra.mxu0 0.0
      %758 = vmatpush.msra.mxu0 0.0
      %759 = vmatpush.msra.mxu0 0.0
      %760 = vmatpush.msra.mxu0 0.0
      %761 = vmatpush.msra.mxu0 0.0
      %762 = vmatpush.msra.mxu0 0.0
      %763 = vmatpush.msra.mxu0 0.0
      %764 = vmatpush.msra.mxu0 0.0
      %765 = vmatpush.msra.mxu0 0.0
      %766 = vmatpush.msra.mxu0 0.0
      %767 = vmatpush.msra.mxu0 0.0
      %768 = vmatpush.msra.mxu0 0.0
      %769 = vmatpush.msra.mxu0 0.0
      %770 = vmatpush.msra.mxu0 0.0
      %771 = vmatpush.msra.mxu0 0.0
      %772 = vmatpush.msra.mxu0 %v715
      %773 = vmatmul.f32.gmra.mxu0 %v709
      %v774 = vpop.f32.mrf.mxu0
      %v775 = vadd.f32 0.0, %v774
      %776 = vdwg.mxu0
      %779 = vst [vmem:[#allocation1] ss:$2 sm:$0xff] %v688
      %s780 = scalar_lea.vmem [#allocation1], 16
      %781 = vst [vmem:[%s780] ss:$2 sm:$0xff] %v689
      %v782 = vld.sshfl [vmem:[#allocation1] sm:$0xff pattern:$0x75316420]
      %v783 = vld.sshfl [vmem:[#allocation1 + $0x8] sm:$0xff pattern:$0x75316420]
      %v784 = vld.sshfl [vmem:[#allocation1 + $0x10] sm:$0xff pattern:$0x75316420]
      %785 = vrot.lane.b32.xlu0 %v782, 108
      %v786 = vpop.permute.xlu0 %785
      %787 = vrot.lane.b32.xlu0 %v783, 108
      %v788 = vpop.permute.xlu0 %787
      %789 = vrot.lane.b32.xlu0 %v784, 108
      %v790 = vpop.permute.xlu0 %789
      %vm791 = vcmask 883712
      %v792 = vsel %vm791, %v786, %v788
      %v793 = vsel %vm791, %v788, %v790
      %v795 = vsel %vm313, %v691, 0
      %v797 = vsel %vm317, %v792, 0
      %v799 = vsel %vm317, %v793, 0
      %v801 = vsel %vm317, %v790, 0
      %803 = vmatpush.msra.mxu0 0.0
      %804 = vmatpush.msra.mxu0 0.0
      %805 = vmatpush.msra.mxu0 0.0
      %806 = vmatpush.msra.mxu0 0.0
      %807 = vmatpush.msra.mxu0 0.0
      %808 = vmatpush.msra.mxu0 0.0
      %809 = vmatpush.msra.mxu0 0.0
      %810 = vmatpush.msra.mxu0 0.0
      %811 = vmatpush.msra.mxu0 0.0
      %812 = vmatpush.msra.mxu0 0.0
      %813 = vmatpush.msra.mxu0 0.0
      %814 = vmatpush.msra.mxu0 0.0
      %815 = vmatpush.msra.mxu0 0.0
      %816 = vmatpush.msra.mxu0 0.0
      %817 = vmatpush.msra.mxu0 0.0
      %818 = vmatpush.msra.mxu0 %v797
      %819 = vmatmul.f32.gmra.mxu0 %v795
      %v820 = vpop.f32.mrf.mxu0
      %v821 = vadd.f32 %v735, %v820
      %822 = vdwg.mxu0
      %823 = vmatpush.msra.mxu0 0.0
      %824 = vmatpush.msra.mxu0 0.0
      %825 = vmatpush.msra.mxu0 0.0
      %826 = vmatpush.msra.mxu0 0.0
      %827 = vmatpush.msra.mxu0 0.0
      %828 = vmatpush.msra.mxu0 0.0
      %829 = vmatpush.msra.mxu0 0.0
      %830 = vmatpush.msra.mxu0 0.0
      %831 = vmatpush.msra.mxu0 0.0
      %832 = vmatpush.msra.mxu0 0.0
      %833 = vmatpush.msra.mxu0 0.0
      %834 = vmatpush.msra.mxu0 0.0
      %835 = vmatpush.msra.mxu0 0.0
      %836 = vmatpush.msra.mxu0 0.0
      %837 = vmatpush.msra.mxu0 0.0
      %838 = vmatpush.msra.mxu0 %v799
      %839 = vmatmul.f32.gmra.mxu0 %v795
      %v840 = vpop.f32.mrf.mxu0
      %v841 = vadd.f32 %v755, %v840
      %842 = vdwg.mxu0
      %843 = vmatpush.msra.mxu0 0.0
      %844 = vmatpush.msra.mxu0 0.0
      %845 = vmatpush.msra.mxu0 0.0
      %846 = vmatpush.msra.mxu0 0.0
      %847 = vmatpush.msra.mxu0 0.0
      %848 = vmatpush.msra.mxu0 0.0
      %849 = vmatpush.msra.mxu0 0.0
      %850 = vmatpush.msra.mxu0 0.0
      %851 = vmatpush.msra.mxu0 0.0
      %852 = vmatpush.msra.mxu0 0.0
      %853 = vmatpush.msra.mxu0 0.0
      %854 = vmatpush.msra.mxu0 0.0
      %855 = vmatpush.msra.mxu0 0.0
      %856 = vmatpush.msra.mxu0 0.0
      %857 = vmatpush.msra.mxu0 0.0
      %858 = vmatpush.msra.mxu0 %v801
      %859 = vmatmul.f32.gmra.mxu0 %v795
      %v860 = vpop.f32.mrf.mxu0
      %v861 = vadd.f32 %v775, %v860
      %862 = vdwg.mxu0
      %v863 = vld [vmem:[%s172] sm:$0xff]
      %v864 = vld [vmem:[%s172 + $0x8] sm:$0xf]
      %s865 = scalar_lea.vmem %s1, 12
      %v866 = vld [vmem:[%s865] sm:$0x3]
      %869 = vst [vmem:[#allocation1] ss:$2 sm:$0xff] %v863
      %s870 = scalar_lea.vmem [#allocation1], 16
      %871 = vst [vmem:[%s870] ss:$2 sm:$0xff] %v864
      %v872 = vld.sshfl [vmem:[#allocation1] sm:$0xff pattern:$0x75316420]
      %v873 = vld.sshfl [vmem:[#allocation1 + $0x8] sm:$0xff pattern:$0x75316420]
      %v874 = vld.sshfl [vmem:[#allocation1 + $0x10] sm:$0xff pattern:$0x75316420]
      %875 = vrot.lane.b32.xlu0 %v872, 126
      %v876 = vpop.permute.xlu0 %875
      %877 = vrot.lane.b32.xlu0 %v873, 126
      %v878 = vpop.permute.xlu0 %877
      %879 = vrot.lane.b32.xlu0 %v874, 126
      %v880 = vpop.permute.xlu0 %879
      %vm881 = vcmask 1031168
      %v882 = vsel %vm881, %v876, %v878
      %v883 = vsel %vm881, %v878, %v880
      %v885 = vsel %vm313, %v866, 0
      %v887 = vsel %vm317, %v882, 0
      %v889 = vsel %vm317, %v883, 0
      %v891 = vsel %vm317, %v880, 0
      %893 = vmatpush.msra.mxu0 0.0
      %894 = vmatpush.msra.mxu0 0.0
      %895 = vmatpush.msra.mxu0 0.0
      %896 = vmatpush.msra.mxu0 0.0
      %897 = vmatpush.msra.mxu0 0.0
      %898 = vmatpush.msra.mxu0 0.0
      %899 = vmatpush.msra.mxu0 0.0
      %900 = vmatpush.msra.mxu0 0.0
      %901 = vmatpush.msra.mxu0 0.0
      %902 = vmatpush.msra.mxu0 0.0
      %903 = vmatpush.msra.mxu0 0.0
      %904 = vmatpush.msra.mxu0 0.0
      %905 = vmatpush.msra.mxu0 0.0
      %906 = vmatpush.msra.mxu0 0.0
      %907 = vmatpush.msra.mxu0 0.0
      %908 = vmatpush.msra.mxu0 %v887
      %909 = vmatmul.f32.gmra.mxu0 %v885
      %v910 = vpop.f32.mrf.mxu0
      %v911 = vadd.f32 0.0, %v910
      %912 = vdwg.mxu0
      %913 = vmatpush.msra.mxu0 0.0
      %914 = vmatpush.msra.mxu0 0.0
      %915 = vmatpush.msra.mxu0 0.0
      %916 = vmatpush.msra.mxu0 0.0
      %917 = vmatpush.msra.mxu0 0.0
      %918 = vmatpush.msra.mxu0 0.0
      %919 = vmatpush.msra.mxu0 0.0
      %920 = vmatpush.msra.mxu0 0.0
      %921 = vmatpush.msra.mxu0 0.0
      %922 = vmatpush.msra.mxu0 0.0
      %923 = vmatpush.msra.mxu0 0.0
      %924 = vmatpush.msra.mxu0 0.0
      %925 = vmatpush.msra.mxu0 0.0
      %926 = vmatpush.msra.mxu0 0.0
      %927 = vmatpush.msra.mxu0 0.0
      %928 = vmatpush.msra.mxu0 %v889
      %929 = vmatmul.f32.gmra.mxu0 %v885
      %v930 = vpop.f32.mrf.mxu0
      %v931 = vadd.f32 0.0, %v930
      %932 = vdwg.mxu0
      %933 = vmatpush.msra.mxu0 0.0
      %934 = vmatpush.msra.mxu0 0.0
      %935 = vmatpush.msra.mxu0 0.0
      %936 = vmatpush.msra.mxu0 0.0
      %937 = vmatpush.msra.mxu0 0.0
      %938 = vmatpush.msra.mxu0 0.0
      %939 = vmatpush.msra.mxu0 0.0
      %940 = vmatpush.msra.mxu0 0.0
      %941 = vmatpush.msra.mxu0 0.0
      %942 = vmatpush.msra.mxu0 0.0
      %943 = vmatpush.msra.mxu0 0.0
      %944 = vmatpush.msra.mxu0 0.0
      %945 = vmatpush.msra.mxu0 0.0
      %946 = vmatpush.msra.mxu0 0.0
      %947 = vmatpush.msra.mxu0 0.0
      %948 = vmatpush.msra.mxu0 %v891
      %949 = vmatmul.f32.gmra.mxu0 %v885
      %v950 = vpop.f32.mrf.mxu0
      %v951 = vadd.f32 0.0, %v950
      %952 = vdwg.mxu0
      %v953 = vadd.f32 %v821, %v911
      %v954 = vadd.f32 %v841, %v931
      %v955 = vadd.f32 %v861, %v951
      %s956 = scalar_lea.vmem %s1, 14
      %v957 = vld [vmem:[%s956] sm:$0x3]
      %958 = vst [vmem:[#allocation1] ss:$2 sm:$0xff] %v468
      %s959 = scalar_lea.vmem [#allocation1], 16
      %960 = vst [vmem:[%s959] ss:$2 sm:$0xff] %v469
      %v961 = vld.sshfl [vmem:[#allocation1] sm:$0xff pattern:$0x75316420]
      %v962 = vld.sshfl [vmem:[#allocation1 + $0x8] sm:$0xff pattern:$0x75316420]
      %v963 = vld.sshfl [vmem:[#allocation1 + $0x10] sm:$0xff pattern:$0x75316420]
      %964 = vrot.lane.b32.xlu0 %v961, 127
      %v965 = vpop.permute.xlu0 %964
      %966 = vrot.lane.b32.xlu0 %v962, 127
      %v967 = vpop.permute.xlu0 %966
      %968 = vrot.lane.b32.xlu0 %v963, 127
      %v969 = vpop.permute.xlu0 %968
      %v970 = vsel %vm486, %v965, %v967
      %v971 = vsel %vm486, %v967, %v969
      %v973 = vsel %vm313, %v957, 0
      %v975 = vsel %vm317, %v970, 0
      %v977 = vsel %vm317, %v971, 0
      %v979 = vsel %vm317, %v969, 0
      %981 = vmatpush.msra.mxu0 0.0
      %982 = vmatpush.msra.mxu0 0.0
      %983 = vmatpush.msra.mxu0 0.0
      %984 = vmatpush.msra.mxu0 0.0
      %985 = vmatpush.msra.mxu0 0.0
      %986 = vmatpush.msra.mxu0 0.0
      %987 = vmatpush.msra.mxu0 0.0
      %988 = vmatpush.msra.mxu0 0.0
      %989 = vmatpush.msra.mxu0 0.0
      %990 = vmatpush.msra.mxu0 0.0
      %991 = vmatpush.msra.mxu0 0.0
      %992 = vmatpush.msra.mxu0 0.0
      %993 = vmatpush.msra.mxu0 0.0
      %994 = vmatpush.msra.mxu0 0.0
      %995 = vmatpush.msra.mxu0 0.0
      %996 = vmatpush.msra.mxu0 %v975
      %997 = vmatmul.f32.gmra.mxu0 %v973
      %v998 = vpop.f32.mrf.mxu0
      %v999 = vadd.f32 0.0, %v998
      %1000 = vdwg.mxu0
      %1001 = vmatpush.msra.mxu0 0.0
      %1002 = vmatpush.msra.mxu0 0.0
      %1003 = vmatpush.msra.mxu0 0.0
      %1004 = vmatpush.msra.mxu0 0.0
      %1005 = vmatpush.msra.mxu0 0.0
      %1006 = vmatpush.msra.mxu0 0.0
      %1007 = vmatpush.msra.mxu0 0.0
      %1008 = vmatpush.msra.mxu0 0.0
      %1009 = vmatpush.msra.mxu0 0.0
      %1010 = vmatpush.msra.mxu0 0.0
      %1011 = vmatpush.msra.mxu0 0.0
      %1012 = vmatpush.msra.mxu0 0.0
      %1013 = vmatpush.msra.mxu0 0.0
      %1014 = vmatpush.msra.mxu0 0.0
      %1015 = vmatpush.msra.mxu0 0.0
      %1016 = vmatpush.msra.mxu0 %v977
      %1017 = vmatmul.f32.gmra.mxu0 %v973
      %v1018 = vpop.f32.mrf.mxu0
      %v1019 = vadd.f32 0.0, %v1018
      %1020 = vdwg.mxu0
      %1021 = vmatpush.msra.mxu0 0.0
      %1022 = vmatpush.msra.mxu0 0.0
      %1023 = vmatpush.msra.mxu0 0.0
      %1024 = vmatpush.msra.mxu0 0.0
      %1025 = vmatpush.msra.mxu0 0.0
      %1026 = vmatpush.msra.mxu0 0.0
      %1027 = vmatpush.msra.mxu0 0.0
      %1028 = vmatpush.msra.mxu0 0.0
      %1029 = vmatpush.msra.mxu0 0.0
      %1030 = vmatpush.msra.mxu0 0.0
      %1031 = vmatpush.msra.mxu0 0.0
      %1032 = vmatpush.msra.mxu0 0.0
      %1033 = vmatpush.msra.mxu0 0.0
      %1034 = vmatpush.msra.mxu0 0.0
      %1035 = vmatpush.msra.mxu0 0.0
      %1036 = vmatpush.msra.mxu0 %v979
      %1037 = vmatmul.f32.gmra.mxu0 %v973
      %v1038 = vpop.f32.mrf.mxu0
      %v1039 = vadd.f32 0.0, %v1038
      %1040 = vdwg.mxu0
      %v1041 = vadd.f32 %v953, %v999
      %v1042 = vadd.f32 %v954, %v1019
      %v1043 = vadd.f32 %v955, %v1039
      %v1047 = vrot.slane %v1042, 6
      %v1048 = vrot.slane %v1043, 4
      %v1049 = vsel %vm650, %v1041, %v1047
      %v1050 = vsel %vm317, %v1049, %v1048
      %s1052 = scalar_lea.vmem %s177, 6
      %1053 = vst.msk [vmem:[%s1052] sm:$0x3f] %vm657, %v1050
      %v1054 = vsel %vm662, %v1041, 0.0
      %v1055 = vsel %vm663, %v1042, 0.0
      %v1056 = vsel %vm664, %v1043, 0.0
      %v1057 = vsel %vm650, %v1054, 0.0
      %v1058 = vsel %vm650, %v1055, 0.0
      %v1059 = vadd.f32 %v1057, %v1058
      %v1060 = vsel %vm671, %v1056, 0.0
      %v1061 = vadd.f32 %v1059, %v1060
      %1062 = vadd.xlane.f32.xlu0 %v1061
      %v1063 = vpop.xlane.xlu0 %1062
      %v1064 = vadd.f32 %v676, %v1063
      %v1065 = vmul.f32 %v1054, %v1054
      %v1066 = vmul.f32 %v1055, %v1055
      %v1067 = vmul.f32 %v1056, %v1056
      %v1068 = vsel %vm650, %v1065, 0.0
      %v1069 = vsel %vm650, %v1066, 0.0
      %v1070 = vadd.f32 %v1068, %v1069
      %v1071 = vsel %vm671, %v1067, 0.0
      %v1072 = vadd.f32 %v1070, %v1071
      %1073 = vadd.xlane.f32.xlu0 %v1072
      %v1074 = vpop.xlane.xlu0 %1073
      %v1075 = vadd.f32 %v687, %v1074
      %v1076 = vld [vmem:[%s172] sm:$0xff]
      %v1077 = vld [vmem:[%s172 + $0x8] sm:$0xf]
      %s1078 = scalar_lea.vmem %s1, 16
      %v1079 = vld [vmem:[%s1078] sm:$0x3]
      %s1080 = scalar_lea.vmem %s1, 18
      %v1081 = vld [vmem:[%s1080] sm:$0x3]
      %1084 = vst [vmem:[#allocation1] ss:$2 sm:$0xff] %v1076
      %s1085 = scalar_lea.vmem [#allocation1], 16
      %1086 = vst [vmem:[%s1085] ss:$2 sm:$0xff] %v1077
      %v1087 = vld.sshfl [vmem:[#allocation1] sm:$0xff pattern:$0x75316420]
      %v1088 = vld.sshfl [vmem:[#allocation1 + $0x8] sm:$0xff pattern:$0x75316420]
      %v1089 = vld.sshfl [vmem:[#allocation1 + $0x10] sm:$0xff pattern:$0x75316420]
      %1090 = vrot.lane.b32.xlu0 %v1087, 92
      %v1091 = vpop.permute.xlu0 %1090
      %1092 = vrot.lane.b32.xlu0 %v1088, 92
      %v1093 = vpop.permute.xlu0 %1092
      %1094 = vrot.lane.b32.xlu0 %v1089, 92
      %v1095 = vpop.permute.xlu0 %1094
      %vm1096 = vcmask 752640
      %v1097 = vsel %vm1096, %v1091, %v1093
      %v1098 = vsel %vm1096, %v1093, %v1095
      %v1100 = vsel %vm313, %v1081, 0
      %v1102 = vsel %vm317, %v1097, 0
      %v1104 = vsel %vm317, %v1098, 0
      %v1106 = vsel %vm317, %v1095, 0
      %1108 = vmatpush.msra.mxu0 0.0
      %1109 = vmatpush.msra.mxu0 0.0
      %1110 = vmatpush.msra.mxu0 0.0
      %1111 = vmatpush.msra.mxu0 0.0
      %1112 = vmatpush.msra.mxu0 0.0
      %1113 = vmatpush.msra.mxu0 0.0
      %1114 = vmatpush.msra.mxu0 0.0
      %1115 = vmatpush.msra.mxu0 0.0
      %1116 = vmatpush.msra.mxu0 0.0
      %1117 = vmatpush.msra.mxu0 0.0
      %1118 = vmatpush.msra.mxu0 0.0
      %1119 = vmatpush.msra.mxu0 0.0
      %1120 = vmatpush.msra.mxu0 0.0
      %1121 = vmatpush.msra.mxu0 0.0
      %1122 = vmatpush.msra.mxu0 0.0
      %1123 = vmatpush.msra.mxu0 %v1102
      %1124 = vmatmul.f32.gmra.mxu0 %v1100
      %v1125 = vpop.f32.mrf.mxu0
      %v1126 = vadd.f32 0.0, %v1125
      %1127 = vdwg.mxu0
      %1128 = vmatpush.msra.mxu0 0.0
      %1129 = vmatpush.msra.mxu0 0.0
      %1130 = vmatpush.msra.mxu0 0.0
      %1131 = vmatpush.msra.mxu0 0.0
      %1132 = vmatpush.msra.mxu0 0.0
      %1133 = vmatpush.msra.mxu0 0.0
      %1134 = vmatpush.msra.mxu0 0.0
      %1135 = vmatpush.msra.mxu0 0.0
      %1136 = vmatpush.msra.mxu0 0.0
      %1137 = vmatpush.msra.mxu0 0.0
      %1138 = vmatpush.msra.mxu0 0.0
      %1139 = vmatpush.msra.mxu0 0.0
      %1140 = vmatpush.msra.mxu0 0.0
      %1141 = vmatpush.msra.mxu0 0.0
      %1142 = vmatpush.msra.mxu0 0.0
      %1143 = vmatpush.msra.mxu0 %v1104
      %1144 = vmatmul.f32.gmra.mxu0 %v1100
      %v1145 = vpop.f32.mrf.mxu0
      %v1146 = vadd.f32 0.0, %v1145
      %1147 = vdwg.mxu0
      %1148 = vmatpush.msra.mxu0 0.0
      %1149 = vmatpush.msra.mxu0 0.0
      %1150 = vmatpush.msra.mxu0 0.0
      %1151 = vmatpush.msra.mxu0 0.0
      %1152 = vmatpush.msra.mxu0 0.0
      %1153 = vmatpush.msra.mxu0 0.0
      %1154 = vmatpush.msra.mxu0 0.0
      %1155 = vmatpush.msra.mxu0 0.0
      %1156 = vmatpush.msra.mxu0 0.0
      %1157 = vmatpush.msra.mxu0 0.0
      %1158 = vmatpush.msra.mxu0 0.0
      %1159 = vmatpush.msra.mxu0 0.0
      %1160 = vmatpush.msra.mxu0 0.0
      %1161 = vmatpush.msra.mxu0 0.0
      %1162 = vmatpush.msra.mxu0 0.0
      %1163 = vmatpush.msra.mxu0 %v1106
      %1164 = vmatmul.f32.gmra.mxu0 %v1100
      %v1165 = vpop.f32.mrf.mxu0
      %v1166 = vadd.f32 0.0, %v1165
      %1167 = vdwg.mxu0
      %1168 = vst [vmem:[#allocation1] ss:$2 sm:$0xff] %v1076
      %s1169 = scalar_lea.vmem [#allocation1], 16
      %1170 = vst [vmem:[%s1169] ss:$2 sm:$0xff] %v1077
      %v1171 = vld.sshfl [vmem:[#allocation1] sm:$0xff pattern:$0x75316420]
      %v1172 = vld.sshfl [vmem:[#allocation1 + $0x8] sm:$0xff pattern:$0x75316420]
      %v1173 = vld.sshfl [vmem:[#allocation1 + $0x10] sm:$0xff pattern:$0x75316420]
      %1174 = vrot.lane.b32.xlu0 %v1171, 91
      %v1175 = vpop.permute.xlu0 %1174
      %1176 = vrot.lane.b32.xlu0 %v1172, 91
      %v1177 = vpop.permute.xlu0 %1176
      %1178 = vrot.lane.b32.xlu0 %v1173, 91
      %v1179 = vpop.permute.xlu0 %1178
      %vm1180 = vcmask 744448
      %v1181 = vsel %vm1180, %v1175, %v1177
      %v1182 = vsel %vm1180, %v1177, %v1179
      %v1184 = vsel %vm313, %v1079, 0
      %v1186 = vsel %vm317, %v1181, 0
      %v1188 = vsel %vm317, %v1182, 0
      %v1190 = vsel %vm317, %v1179, 0
      %1192 = vmatpush.msra.mxu0 0.0
      %1193 = vmatpush.msra.mxu0 0.0
      %1194 = vmatpush.msra.mxu0 0.0
      %1195 = vmatpush.msra.mxu0 0.0
      %1196 = vmatpush.msra.mxu0 0.0
      %1197 = vmatpush.msra.mxu0 0.0
      %1198 = vmatpush.msra.mxu0 0.0
      %1199 = vmatpush.msra.mxu0 0.0
      %1200 = vmatpush.msra.mxu0 0.0
      %1201 = vmatpush.msra.mxu0 0.0
      %1202 = vmatpush.msra.mxu0 0.0
      %1203 = vmatpush.msra.mxu0 0.0
      %1204 = vmatpush.msra.mxu0 0.0
      %1205 = vmatpush.msra.mxu0 0.0
      %1206 = vmatpush.msra.mxu0 0.0
      %1207 = vmatpush.msra.mxu0 %v1186
      %1208 = vmatmul.f32.gmra.mxu0 %v1184
      %v1209 = vpop.f32.mrf.mxu0
      %v1210 = vadd.f32 %v1126, %v1209
      %1211 = vdwg.mxu0
      %1212 = vmatpush.msra.mxu0 0.0
      %1213 = vmatpush.msra.mxu0 0.0
      %1214 = vmatpush.msra.mxu0 0.0
      %1215 = vmatpush.msra.mxu0 0.0
      %1216 = vmatpush.msra.mxu0 0.0
      %1217 = vmatpush.msra.mxu0 0.0
      %1218 = vmatpush.msra.mxu0 0.0
      %1219 = vmatpush.msra.mxu0 0.0
      %1220 = vmatpush.msra.mxu0 0.0
      %1221 = vmatpush.msra.mxu0 0.0
      %1222 = vmatpush.msra.mxu0 0.0
      %1223 = vmatpush.msra.mxu0 0.0
      %1224 = vmatpush.msra.mxu0 0.0
      %1225 = vmatpush.msra.mxu0 0.0
      %1226 = vmatpush.msra.mxu0 0.0
      %1227 = vmatpush.msra.mxu0 %v1188
      %1228 = vmatmul.f32.gmra.mxu0 %v1184
      %v1229 = vpop.f32.mrf.mxu0
      %v1230 = vadd.f32 %v1146, %v1229
      %1231 = vdwg.mxu0
      %1232 = vmatpush.msra.mxu0 0.0
      %1233 = vmatpush.msra.mxu0 0.0
      %1234 = vmatpush.msra.mxu0 0.0
      %1235 = vmatpush.msra.mxu0 0.0
      %1236 = vmatpush.msra.mxu0 0.0
      %1237 = vmatpush.msra.mxu0 0.0
      %1238 = vmatpush.msra.mxu0 0.0
      %1239 = vmatpush.msra.mxu0 0.0
      %1240 = vmatpush.msra.mxu0 0.0
      %1241 = vmatpush.msra.mxu0 0.0
      %1242 = vmatpush.msra.mxu0 0.0
      %1243 = vmatpush.msra.mxu0 0.0
      %1244 = vmatpush.msra.mxu0 0.0
      %1245 = vmatpush.msra.mxu0 0.0
      %1246 = vmatpush.msra.mxu0 0.0
      %1247 = vmatpush.msra.mxu0 %v1190
      %1248 = vmatmul.f32.gmra.mxu0 %v1184
      %v1249 = vpop.f32.mrf.mxu0
      %v1250 = vadd.f32 %v1166, %v1249
      %1251 = vdwg.mxu0
      %s1252 = scalar_lea.vmem %s1, 20
      %v1253 = vld [vmem:[%s1252] sm:$0x3]
      %1254 = vst [vmem:[#allocation1] ss:$2 sm:$0xff] %v291
      %s1255 = scalar_lea.vmem [#allocation1], 16
      %1256 = vst [vmem:[%s1255] ss:$2 sm:$0xff] %v292
      %v1257 = vld.sshfl [vmem:[#allocation1] sm:$0xff pattern:$0x75316420]
      %v1258 = vld.sshfl [vmem:[#allocation1 + $0x8] sm:$0xff pattern:$0x75316420]
      %v1259 = vld.sshfl [vmem:[#allocation1 + $0x10] sm:$0xff pattern:$0x75316420]
      %1260 = vrot.lane.b32.xlu0 %v1257, 109
      %v1261 = vpop.permute.xlu0 %1260
      %1262 = vrot.lane.b32.xlu0 %v1258, 109
      %v1263 = vpop.permute.xlu0 %1262
      %1264 = vrot.lane.b32.xlu0 %v1259, 109
      %v1265 = vpop.permute.xlu0 %1264
      %v1266 = vsel %vm396, %v1261, %v1263
      %v1267 = vsel %vm396, %v1263, %v1265
      %v1269 = vsel %vm313, %v1253, 0
      %v1271 = vsel %vm317, %v1266, 0
      %v1273 = vsel %vm317, %v1267, 0
      %v1275 = vsel %vm317, %v1265, 0
      %1277 = vmatpush.msra.mxu0 0.0
      %1278 = vmatpush.msra.mxu0 0.0
      %1279 = vmatpush.msra.mxu0 0.0
      %1280 = vmatpush.msra.mxu0 0.0
      %1281 = vmatpush.msra.mxu0 0.0
      %1282 = vmatpush.msra.mxu0 0.0
      %1283 = vmatpush.msra.mxu0 0.0
      %1284 = vmatpush.msra.mxu0 0.0
      %1285 = vmatpush.msra.mxu0 0.0
      %1286 = vmatpush.msra.mxu0 0.0
      %1287 = vmatpush.msra.mxu0 0.0
      %1288 = vmatpush.msra.mxu0 0.0
      %1289 = vmatpush.msra.mxu0 0.0
      %1290 = vmatpush.msra.mxu0 0.0
      %1291 = vmatpush.msra.mxu0 0.0
      %1292 = vmatpush.msra.mxu0 %v1271
      %1293 = vmatmul.f32.gmra.mxu0 %v1269
      %v1294 = vpop.f32.mrf.mxu0
      %v1295 = vadd.f32 0.0, %v1294
      %1296 = vdwg.mxu0
      %1297 = vmatpush.msra.mxu0 0.0
      %1298 = vmatpush.msra.mxu0 0.0
      %1299 = vmatpush.msra.mxu0 0.0
      %1300 = vmatpush.msra.mxu0 0.0
      %1301 = vmatpush.msra.mxu0 0.0
      %1302 = vmatpush.msra.mxu0 0.0
      %1303 = vmatpush.msra.mxu0 0.0
      %1304 = vmatpush.msra.mxu0 0.0
      %1305 = vmatpush.msra.mxu0 0.0
      %1306 = vmatpush.msra.mxu0 0.0
      %1307 = vmatpush.msra.mxu0 0.0
      %1308 = vmatpush.msra.mxu0 0.0
      %1309 = vmatpush.msra.mxu0 0.0
      %1310 = vmatpush.msra.mxu0 0.0
      %1311 = vmatpush.msra.mxu0 0.0
      %1312 = vmatpush.msra.mxu0 %v1273
      %1313 = vmatmul.f32.gmra.mxu0 %v1269
      %v1314 = vpop.f32.mrf.mxu0
      %v1315 = vadd.f32 0.0, %v1314
      %1316 = vdwg.mxu0
      %1317 = vmatpush.msra.mxu0 0.0
      %1318 = vmatpush.msra.mxu0 0.0
      %1319 = vmatpush.msra.mxu0 0.0
      %1320 = vmatpush.msra.mxu0 0.0
      %1321 = vmatpush.msra.mxu0 0.0
      %1322 = vmatpush.msra.mxu0 0.0
      %1323 = vmatpush.msra.mxu0 0.0
      %1324 = vmatpush.msra.mxu0 0.0
      %1325 = vmatpush.msra.mxu0 0.0
      %1326 = vmatpush.msra.mxu0 0.0
      %1327 = vmatpush.msra.mxu0 0.0
      %1328 = vmatpush.msra.mxu0 0.0
      %1329 = vmatpush.msra.mxu0 0.0
      %1330 = vmatpush.msra.mxu0 0.0
      %1331 = vmatpush.msra.mxu0 0.0
      %1332 = vmatpush.msra.mxu0 %v1275
      %1333 = vmatmul.f32.gmra.mxu0 %v1269
      %v1334 = vpop.f32.mrf.mxu0
      %v1335 = vadd.f32 0.0, %v1334
      %1336 = vdwg.mxu0
      %v1337 = vadd.f32 %v1210, %v1295
      %v1338 = vadd.f32 %v1230, %v1315
      %v1339 = vadd.f32 %v1250, %v1335
      %s1340 = scalar_lea.vmem %s1, 22
      %v1341 = vld [vmem:[%s1340] sm:$0x3]
      %1342 = vst [vmem:[#allocation1] ss:$2 sm:$0xff] %v291
      %s1343 = scalar_lea.vmem [#allocation1], 16
      %1344 = vst [vmem:[%s1343] ss:$2 sm:$0xff] %v292
      %v1345 = vld.sshfl [vmem:[#allocation1] sm:$0xff pattern:$0x75316420]
      %v1346 = vld.sshfl [vmem:[#allocation1 + $0x8] sm:$0xff pattern:$0x75316420]
      %v1347 = vld.sshfl [vmem:[#allocation1 + $0x10] sm:$0xff pattern:$0x75316420]
      %1348 = vrot.lane.b32.xlu0 %v1345, 110
      %v1349 = vpop.permute.xlu0 %1348
      %1350 = vrot.lane.b32.xlu0 %v1346, 110
      %v1351 = vpop.permute.xlu0 %1350
      %1352 = vrot.lane.b32.xlu0 %v1347, 110
      %v1353 = vpop.permute.xlu0 %1352
      %v1354 = vsel %vm310, %v1349, %v1351
      %v1355 = vsel %vm310, %v1351, %v1353
      %v1357 = vsel %vm313, %v1341, 0
      %v1359 = vsel %vm317, %v1354, 0
      %v1361 = vsel %vm317, %v1355, 0
      %v1363 = vsel %vm317, %v1353, 0
      %1365 = vmatpush.msra.mxu0 0.0
      %1366 = vmatpush.msra.mxu0 0.0
      %1367 = vmatpush.msra.mxu0 0.0
      %1368 = vmatpush.msra.mxu0 0.0
      %1369 = vmatpush.msra.mxu0 0.0
      %1370 = vmatpush.msra.mxu0 0.0
      %1371 = vmatpush.msra.mxu0 0.0
      %1372 = vmatpush.msra.mxu0 0.0
      %1373 = vmatpush.msra.mxu0 0.0
      %1374 = vmatpush.msra.mxu0 0.0
      %1375 = vmatpush.msra.mxu0 0.0
      %1376 = vmatpush.msra.mxu0 0.0
      %1377 = vmatpush.msra.mxu0 0.0
      %1378 = vmatpush.msra.mxu0 0.0
      %1379 = vmatpush.msra.mxu0 0.0
      %1380 = vmatpush.msra.mxu0 %v1359
      %1381 = vmatmul.f32.gmra.mxu0 %v1357
      %v1382 = vpop.f32.mrf.mxu0
      %v1383 = vadd.f32 0.0, %v1382
      %1384 = vdwg.mxu0
      %1385 = vmatpush.msra.mxu0 0.0
      %1386 = vmatpush.msra.mxu0 0.0
      %1387 = vmatpush.msra.mxu0 0.0
      %1388 = vmatpush.msra.mxu0 0.0
      %1389 = vmatpush.msra.mxu0 0.0
      %1390 = vmatpush.msra.mxu0 0.0
      %1391 = vmatpush.msra.mxu0 0.0
      %1392 = vmatpush.msra.mxu0 0.0
      %1393 = vmatpush.msra.mxu0 0.0
      %1394 = vmatpush.msra.mxu0 0.0
      %1395 = vmatpush.msra.mxu0 0.0
      %1396 = vmatpush.msra.mxu0 0.0
      %1397 = vmatpush.msra.mxu0 0.0
      %1398 = vmatpush.msra.mxu0 0.0
      %1399 = vmatpush.msra.mxu0 0.0
      %1400 = vmatpush.msra.mxu0 %v1361
      %1401 = vmatmul.f32.gmra.mxu0 %v1357
      %v1402 = vpop.f32.mrf.mxu0
      %v1403 = vadd.f32 0.0, %v1402
      %1404 = vdwg.mxu0
      %1405 = vmatpush.msra.mxu0 0.0
      %1406 = vmatpush.msra.mxu0 0.0
      %1407 = vmatpush.msra.mxu0 0.0
      %1408 = vmatpush.msra.mxu0 0.0
      %1409 = vmatpush.msra.mxu0 0.0
      %1410 = vmatpush.msra.mxu0 0.0
      %1411 = vmatpush.msra.mxu0 0.0
      %1412 = vmatpush.msra.mxu0 0.0
      %1413 = vmatpush.msra.mxu0 0.0
      %1414 = vmatpush.msra.mxu0 0.0
      %1415 = vmatpush.msra.mxu0 0.0
      %1416 = vmatpush.msra.mxu0 0.0
      %1417 = vmatpush.msra.mxu0 0.0
      %1418 = vmatpush.msra.mxu0 0.0
      %1419 = vmatpush.msra.mxu0 0.0
      %1420 = vmatpush.msra.mxu0 %v1363
      %1421 = vmatmul.f32.gmra.mxu0 %v1357
      %v1422 = vpop.f32.mrf.mxu0
      %v1423 = vadd.f32 0.0, %v1422
      %1424 = vdwg.mxu0
      %v1425 = vadd.f32 %v1337, %v1383
      %v1426 = vadd.f32 %v1338, %v1403
      %v1427 = vadd.f32 %v1339, %v1423
      %v1431 = vrot.slane %v1426, 6
      %v1432 = vrot.slane %v1427, 4
      %v1433 = vsel %vm650, %v1425, %v1431
      %v1434 = vsel %vm317, %v1433, %v1432
      %s1436 = scalar_lea.vmem %s177, 12
      %1437 = vst.msk [vmem:[%s1436] sm:$0x3f] %vm657, %v1434
      %v1438 = vsel %vm662, %v1425, 0.0
      %v1439 = vsel %vm663, %v1426, 0.0
      %v1440 = vsel %vm664, %v1427, 0.0
      %v1441 = vsel %vm650, %v1438, 0.0
      %v1442 = vsel %vm650, %v1439, 0.0
      %v1443 = vadd.f32 %v1441, %v1442
      %v1444 = vsel %vm671, %v1440, 0.0
      %v1445 = vadd.f32 %v1443, %v1444
      %1446 = vadd.xlane.f32.xlu0 %v1445
      %v1447 = vpop.xlane.xlu0 %1446
      %v1448 = vadd.f32 %v1064, %v1447
      %v1449 = vmul.f32 %v1438, %v1438
      %v1450 = vmul.f32 %v1439, %v1439
      %v1451 = vmul.f32 %v1440, %v1440
      %v1452 = vsel %vm650, %v1449, 0.0
      %v1453 = vsel %vm650, %v1450, 0.0
      %v1454 = vadd.f32 %v1452, %v1453
      %v1455 = vsel %vm671, %v1451, 0.0
      %v1456 = vadd.f32 %v1454, %v1455
      %1457 = vadd.xlane.f32.xlu0 %v1456
      %v1458 = vpop.xlane.xlu0 %1457
      %v1459 = vadd.f32 %v1075, %v1458
      %v1460 = vld [vmem:[%s172] sm:$0xff]
      %v1461 = vld [vmem:[%s172 + $0x8] sm:$0xf]
      %s1462 = scalar_lea.vmem %s1, 24
      %v1463 = vld [vmem:[%s1462] sm:$0x3]
      %s1464 = scalar_lea.vmem %s1, 26
      %v1465 = vld [vmem:[%s1464] sm:$0x3]
      %1466 = vst [vmem:[#allocation1] ss:$2 sm:$0xff] %v1076
      %s1467 = scalar_lea.vmem [#allocation1], 16
      %1468 = vst [vmem:[%s1467] ss:$2 sm:$0xff] %v1077
      %v1469 = vld.sshfl [vmem:[#allocation1] sm:$0xff pattern:$0x75316420]
      %v1470 = vld.sshfl [vmem:[#allocation1 + $0x8] sm:$0xff pattern:$0x75316420]
      %v1471 = vld.sshfl [vmem:[#allocation1 + $0x10] sm:$0xff pattern:$0x75316420]
      %1472 = vrot.lane.b32.xlu0 %v1469, 91
      %v1473 = vpop.permute.xlu0 %1472
      %1474 = vrot.lane.b32.xlu0 %v1470, 91
      %v1475 = vpop.permute.xlu0 %1474
      %1476 = vrot.lane.b32.xlu0 %v1471, 91
      %v1477 = vpop.permute.xlu0 %1476
      %v1478 = vsel %vm1180, %v1473, %v1475
      %v1479 = vsel %vm1180, %v1475, %v1477
      %v1481 = vsel %vm313, %v1465, 0
      %v1483 = vsel %vm317, %v1478, 0
      %v1485 = vsel %vm317, %v1479, 0
      %v1487 = vsel %vm317, %v1477, 0
      %1489 = vmatpush.msra.mxu0 0.0
      %1490 = vmatpush.msra.mxu0 0.0
      %1491 = vmatpush.msra.mxu0 0.0
      %1492 = vmatpush.msra.mxu0 0.0
      %1493 = vmatpush.msra.mxu0 0.0
      %1494 = vmatpush.msra.mxu0 0.0
      %1495 = vmatpush.msra.mxu0 0.0
      %1496 = vmatpush.msra.mxu0 0.0
      %1497 = vmatpush.msra.mxu0 0.0
      %1498 = vmatpush.msra.mxu0 0.0
      %1499 = vmatpush.msra.mxu0 0.0
      %1500 = vmatpush.msra.mxu0 0.0
      %1501 = vmatpush.msra.mxu0 0.0
      %1502 = vmatpush.msra.mxu0 0.0
      %1503 = vmatpush.msra.mxu0 0.0
      %1504 = vmatpush.msra.mxu0 %v1483
      %1505 = vmatmul.f32.gmra.mxu0 %v1481
      %v1506 = vpop.f32.mrf.mxu0
      %v1507 = vadd.f32 0.0, %v1506
      %1508 = vdwg.mxu0
      %1509 = vmatpush.msra.mxu0 0.0
      %1510 = vmatpush.msra.mxu0 0.0
      %1511 = vmatpush.msra.mxu0 0.0
      %1512 = vmatpush.msra.mxu0 0.0
      %1513 = vmatpush.msra.mxu0 0.0
      %1514 = vmatpush.msra.mxu0 0.0
      %1515 = vmatpush.msra.mxu0 0.0
      %1516 = vmatpush.msra.mxu0 0.0
      %1517 = vmatpush.msra.mxu0 0.0
      %1518 = vmatpush.msra.mxu0 0.0
      %1519 = vmatpush.msra.mxu0 0.0
      %1520 = vmatpush.msra.mxu0 0.0
      %1521 = vmatpush.msra.mxu0 0.0
      %1522 = vmatpush.msra.mxu0 0.0
      %1523 = vmatpush.msra.mxu0 0.0
      %1524 = vmatpush.msra.mxu0 %v1485
      %1525 = vmatmul.f32.gmra.mxu0 %v1481
      %v1526 = vpop.f32.mrf.mxu0
      %v1527 = vadd.f32 0.0, %v1526
      %1528 = vdwg.mxu0
      %1529 = vmatpush.msra.mxu0 0.0
      %1530 = vmatpush.msra.mxu0 0.0
      %1531 = vmatpush.msra.mxu0 0.0
      %1532 = vmatpush.msra.mxu0 0.0
      %1533 = vmatpush.msra.mxu0 0.0
      %1534 = vmatpush.msra.mxu0 0.0
      %1535 = vmatpush.msra.mxu0 0.0
      %1536 = vmatpush.msra.mxu0 0.0
      %1537 = vmatpush.msra.mxu0 0.0
      %1538 = vmatpush.msra.mxu0 0.0
      %1539 = vmatpush.msra.mxu0 0.0
      %1540 = vmatpush.msra.mxu0 0.0
      %1541 = vmatpush.msra.mxu0 0.0
      %1542 = vmatpush.msra.mxu0 0.0
      %1543 = vmatpush.msra.mxu0 0.0
      %1544 = vmatpush.msra.mxu0 %v1487
      %1545 = vmatmul.f32.gmra.mxu0 %v1481
      %v1546 = vpop.f32.mrf.mxu0
      %v1547 = vadd.f32 0.0, %v1546
      %1548 = vdwg.mxu0
      %1551 = vst [vmem:[#allocation1] ss:$2 sm:$0xff] %v1460
      %s1552 = scalar_lea.vmem [#allocation1], 16
      %1553 = vst [vmem:[%s1552] ss:$2 sm:$0xff] %v1461
      %v1554 = vld.sshfl [vmem:[#allocation1] sm:$0xff pattern:$0x75316420]
      %v1555 = vld.sshfl [vmem:[#allocation1 + $0x8] sm:$0xff pattern:$0x75316420]
      %v1556 = vld.sshfl [vmem:[#allocation1 + $0x10] sm:$0xff pattern:$0x75316420]
      %1557 = vrot.lane.b32.xlu0 %v1554, 90
      %v1558 = vpop.permute.xlu0 %1557
      %1559 = vrot.lane.b32.xlu0 %v1555, 90
      %v1560 = vpop.permute.xlu0 %1559
      %1561 = vrot.lane.b32.xlu0 %v1556, 90
      %v1562 = vpop.permute.xlu0 %1561
      %vm1563 = vcmask 736256
      %v1564 = vsel %vm1563, %v1558, %v1560
      %v1565 = vsel %vm1563, %v1560, %v1562
      %v1567 = vsel %vm313, %v1463, 0
      %v1569 = vsel %vm317, %v1564, 0
      %v1571 = vsel %vm317, %v1565, 0
      %v1573 = vsel %vm317, %v1562, 0
      %1575 = vmatpush.msra.mxu0 0.0
      %1576 = vmatpush.msra.mxu0 0.0
      %1577 = vmatpush.msra.mxu0 0.0
      %1578 = vmatpush.msra.mxu0 0.0
      %1579 = vmatpush.msra.mxu0 0.0
      %1580 = vmatpush.msra.mxu0 0.0
      %1581 = vmatpush.msra.mxu0 0.0
      %1582 = vmatpush.msra.mxu0 0.0
      %1583 = vmatpush.msra.mxu0 0.0
      %1584 = vmatpush.msra.mxu0 0.0
      %1585 = vmatpush.msra.mxu0 0.0
      %1586 = vmatpush.msra.mxu0 0.0
      %1587 = vmatpush.msra.mxu0 0.0
      %1588 = vmatpush.msra.mxu0 0.0
      %1589 = vmatpush.msra.mxu0 0.0
      %1590 = vmatpush.msra.mxu0 %v1569
      %1591 = vmatmul.f32.gmra.mxu0 %v1567
      %v1592 = vpop.f32.mrf.mxu0
      %v1593 = vadd.f32 %v1507, %v1592
      %1594 = vdwg.mxu0
      %1595 = vmatpush.msra.mxu0 0.0
      %1596 = vmatpush.msra.mxu0 0.0
      %1597 = vmatpush.msra.mxu0 0.0
      %1598 = vmatpush.msra.mxu0 0.0
      %1599 = vmatpush.msra.mxu0 0.0
      %1600 = vmatpush.msra.mxu0 0.0
      %1601 = vmatpush.msra.mxu0 0.0
      %1602 = vmatpush.msra.mxu0 0.0
      %1603 = vmatpush.msra.mxu0 0.0
      %1604 = vmatpush.msra.mxu0 0.0
      %1605 = vmatpush.msra.mxu0 0.0
      %1606 = vmatpush.msra.mxu0 0.0
      %1607 = vmatpush.msra.mxu0 0.0
      %1608 = vmatpush.msra.mxu0 0.0
      %1609 = vmatpush.msra.mxu0 0.0
      %1610 = vmatpush.msra.mxu0 %v1571
      %1611 = vmatmul.f32.gmra.mxu0 %v1567
      %v1612 = vpop.f32.mrf.mxu0
      %v1613 = vadd.f32 %v1527, %v1612
      %1614 = vdwg.mxu0
      %1615 = vmatpush.msra.mxu0 0.0
      %1616 = vmatpush.msra.mxu0 0.0
      %1617 = vmatpush.msra.mxu0 0.0
      %1618 = vmatpush.msra.mxu0 0.0
      %1619 = vmatpush.msra.mxu0 0.0
      %1620 = vmatpush.msra.mxu0 0.0
      %1621 = vmatpush.msra.mxu0 0.0
      %1622 = vmatpush.msra.mxu0 0.0
      %1623 = vmatpush.msra.mxu0 0.0
      %1624 = vmatpush.msra.mxu0 0.0
      %1625 = vmatpush.msra.mxu0 0.0
      %1626 = vmatpush.msra.mxu0 0.0
      %1627 = vmatpush.msra.mxu0 0.0
      %1628 = vmatpush.msra.mxu0 0.0
      %1629 = vmatpush.msra.mxu0 0.0
      %1630 = vmatpush.msra.mxu0 %v1573
      %1631 = vmatmul.f32.gmra.mxu0 %v1567
      %v1632 = vpop.f32.mrf.mxu0
      %v1633 = vadd.f32 %v1547, %v1632
      %1634 = vdwg.mxu0
      %s1635 = scalar_lea.vmem %s1, 28
      %v1636 = vld [vmem:[%s1635] sm:$0x3]
      %1637 = vst [vmem:[#allocation1] ss:$2 sm:$0xff] %v688
      %s1638 = scalar_lea.vmem [#allocation1], 16
      %1639 = vst [vmem:[%s1638] ss:$2 sm:$0xff] %v689
      %v1640 = vld.sshfl [vmem:[#allocation1] sm:$0xff pattern:$0x75316420]
      %v1641 = vld.sshfl [vmem:[#allocation1 + $0x8] sm:$0xff pattern:$0x75316420]
      %v1642 = vld.sshfl [vmem:[#allocation1 + $0x10] sm:$0xff pattern:$0x75316420]
      %1643 = vrot.lane.b32.xlu0 %v1640, 108
      %v1644 = vpop.permute.xlu0 %1643
      %1645 = vrot.lane.b32.xlu0 %v1641, 108
      %v1646 = vpop.permute.xlu0 %1645
      %1647 = vrot.lane.b32.xlu0 %v1642, 108
      %v1648 = vpop.permute.xlu0 %1647
      %v1649 = vsel %vm791, %v1644, %v1646
      %v1650 = vsel %vm791, %v1646, %v1648
      %v1652 = vsel %vm313, %v1636, 0
      %v1654 = vsel %vm317, %v1649, 0
      %v1656 = vsel %vm317, %v1650, 0
      %v1658 = vsel %vm317, %v1648, 0
      %1660 = vmatpush.msra.mxu0 0.0
      %1661 = vmatpush.msra.mxu0 0.0
      %1662 = vmatpush.msra.mxu0 0.0
      %1663 = vmatpush.msra.mxu0 0.0
      %1664 = vmatpush.msra.mxu0 0.0
      %1665 = vmatpush.msra.mxu0 0.0
      %1666 = vmatpush.msra.mxu0 0.0
      %1667 = vmatpush.msra.mxu0 0.0
      %1668 = vmatpush.msra.mxu0 0.0
      %1669 = vmatpush.msra.mxu0 0.0
      %1670 = vmatpush.msra.mxu0 0.0
      %1671 = vmatpush.msra.mxu0 0.0
      %1672 = vmatpush.msra.mxu0 0.0
      %1673 = vmatpush.msra.mxu0 0.0
      %1674 = vmatpush.msra.mxu0 0.0
      %1675 = vmatpush.msra.mxu0 %v1654
      %1676 = vmatmul.f32.gmra.mxu0 %v1652
      %v1677 = vpop.f32.mrf.mxu0
      %v1678 = vadd.f32 0.0, %v1677
      %1679 = vdwg.mxu0
      %1680 = vmatpush.msra.mxu0 0.0
      %1681 = vmatpush.msra.mxu0 0.0
      %1682 = vmatpush.msra.mxu0 0.0
      %1683 = vmatpush.msra.mxu0 0.0
      %1684 = vmatpush.msra.mxu0 0.0
      %1685 = vmatpush.msra.mxu0 0.0
      %1686 = vmatpush.msra.mxu0 0.0
      %1687 = vmatpush.msra.mxu0 0.0
      %1688 = vmatpush.msra.mxu0 0.0
      %1689 = vmatpush.msra.mxu0 0.0
      %1690 = vmatpush.msra.mxu0 0.0
      %1691 = vmatpush.msra.mxu0 0.0
      %1692 = vmatpush.msra.mxu0 0.0
      %1693 = vmatpush.msra.mxu0 0.0
      %1694 = vmatpush.msra.mxu0 0.0
      %1695 = vmatpush.msra.mxu0 %v1656
      %1696 = vmatmul.f32.gmra.mxu0 %v1652
      %v1697 = vpop.f32.mrf.mxu0
      %v1698 = vadd.f32 0.0, %v1697
      %1699 = vdwg.mxu0
      %1700 = vmatpush.msra.mxu0 0.0
      %1701 = vmatpush.msra.mxu0 0.0
      %1702 = vmatpush.msra.mxu0 0.0
      %1703 = vmatpush.msra.mxu0 0.0
      %1704 = vmatpush.msra.mxu0 0.0
      %1705 = vmatpush.msra.mxu0 0.0
      %1706 = vmatpush.msra.mxu0 0.0
      %1707 = vmatpush.msra.mxu0 0.0
      %1708 = vmatpush.msra.mxu0 0.0
      %1709 = vmatpush.msra.mxu0 0.0
      %1710 = vmatpush.msra.mxu0 0.0
      %1711 = vmatpush.msra.mxu0 0.0
      %1712 = vmatpush.msra.mxu0 0.0
      %1713 = vmatpush.msra.mxu0 0.0
      %1714 = vmatpush.msra.mxu0 0.0
      %1715 = vmatpush.msra.mxu0 %v1658
      %1716 = vmatmul.f32.gmra.mxu0 %v1652
      %v1717 = vpop.f32.mrf.mxu0
      %v1718 = vadd.f32 0.0, %v1717
      %1719 = vdwg.mxu0
      %v1720 = vadd.f32 %v1593, %v1678
      %v1721 = vadd.f32 %v1613, %v1698
      %v1722 = vadd.f32 %v1633, %v1718
      %s1723 = scalar_lea.vmem %s1, 30
      %v1724 = vld [vmem:[%s1723] sm:$0x3]
      %1725 = vst [vmem:[#allocation1] ss:$2 sm:$0xff] %v291
      %s1726 = scalar_lea.vmem [#allocation1], 16
      %1727 = vst [vmem:[%s1726] ss:$2 sm:$0xff] %v292
      %v1728 = vld.sshfl [vmem:[#allocation1] sm:$0xff pattern:$0x75316420]
      %v1729 = vld.sshfl [vmem:[#allocation1 + $0x8] sm:$0xff pattern:$0x75316420]
      %v1730 = vld.sshfl [vmem:[#allocation1 + $0x10] sm:$0xff pattern:$0x75316420]
      %1731 = vrot.lane.b32.xlu0 %v1728, 109
      %v1732 = vpop.permute.xlu0 %1731
      %1733 = vrot.lane.b32.xlu0 %v1729, 109
      %v1734 = vpop.permute.xlu0 %1733
      %1735 = vrot.lane.b32.xlu0 %v1730, 109
      %v1736 = vpop.permute.xlu0 %1735
      %v1737 = vsel %vm396, %v1732, %v1734
      %v1738 = vsel %vm396, %v1734, %v1736
      %v1740 = vsel %vm313, %v1724, 0
      %v1742 = vsel %vm317, %v1737, 0
      %v1744 = vsel %vm317, %v1738, 0
      %v1746 = vsel %vm317, %v1736, 0
      %1748 = vmatpush.msra.mxu0 0.0
      %1749 = vmatpush.msra.mxu0 0.0
      %1750 = vmatpush.msra.mxu0 0.0
      %1751 = vmatpush.msra.mxu0 0.0
      %1752 = vmatpush.msra.mxu0 0.0
      %1753 = vmatpush.msra.mxu0 0.0
      %1754 = vmatpush.msra.mxu0 0.0
      %1755 = vmatpush.msra.mxu0 0.0
      %1756 = vmatpush.msra.mxu0 0.0
      %1757 = vmatpush.msra.mxu0 0.0
      %1758 = vmatpush.msra.mxu0 0.0
      %1759 = vmatpush.msra.mxu0 0.0
      %1760 = vmatpush.msra.mxu0 0.0
      %1761 = vmatpush.msra.mxu0 0.0
      %1762 = vmatpush.msra.mxu0 0.0
      %1763 = vmatpush.msra.mxu0 %v1742
      %1764 = vmatmul.f32.gmra.mxu0 %v1740
      %v1765 = vpop.f32.mrf.mxu0
      %v1766 = vadd.f32 0.0, %v1765
      %1767 = vdwg.mxu0
      %1768 = vmatpush.msra.mxu0 0.0
      %1769 = vmatpush.msra.mxu0 0.0
      %1770 = vmatpush.msra.mxu0 0.0
      %1771 = vmatpush.msra.mxu0 0.0
      %1772 = vmatpush.msra.mxu0 0.0
      %1773 = vmatpush.msra.mxu0 0.0
      %1774 = vmatpush.msra.mxu0 0.0
      %1775 = vmatpush.msra.mxu0 0.0
      %1776 = vmatpush.msra.mxu0 0.0
      %1777 = vmatpush.msra.mxu0 0.0
      %1778 = vmatpush.msra.mxu0 0.0
      %1779 = vmatpush.msra.mxu0 0.0
      %1780 = vmatpush.msra.mxu0 0.0
      %1781 = vmatpush.msra.mxu0 0.0
      %1782 = vmatpush.msra.mxu0 0.0
      %1783 = vmatpush.msra.mxu0 %v1744
      %1784 = vmatmul.f32.gmra.mxu0 %v1740
      %v1785 = vpop.f32.mrf.mxu0
      %v1786 = vadd.f32 0.0, %v1785
      %1787 = vdwg.mxu0
      %1788 = vmatpush.msra.mxu0 0.0
      %1789 = vmatpush.msra.mxu0 0.0
      %1790 = vmatpush.msra.mxu0 0.0
      %1791 = vmatpush.msra.mxu0 0.0
      %1792 = vmatpush.msra.mxu0 0.0
      %1793 = vmatpush.msra.mxu0 0.0
      %1794 = vmatpush.msra.mxu0 0.0
      %1795 = vmatpush.msra.mxu0 0.0
      %1796 = vmatpush.msra.mxu0 0.0
      %1797 = vmatpush.msra.mxu0 0.0
      %1798 = vmatpush.msra.mxu0 0.0
      %1799 = vmatpush.msra.mxu0 0.0
      %1800 = vmatpush.msra.mxu0 0.0
      %1801 = vmatpush.msra.mxu0 0.0
      %1802 = vmatpush.msra.mxu0 0.0
      %1803 = vmatpush.msra.mxu0 %v1746
      %1804 = vmatmul.f32.gmra.mxu0 %v1740
      %v1805 = vpop.f32.mrf.mxu0
      %v1806 = vadd.f32 0.0, %v1805
      %1807 = vdwg.mxu0
      %v1808 = vadd.f32 %v1720, %v1766
      %v1809 = vadd.f32 %v1721, %v1786
      %v1810 = vadd.f32 %v1722, %v1806
      %v1814 = vrot.slane %v1809, 6
      %v1815 = vrot.slane %v1810, 4
      %v1816 = vsel %vm650, %v1808, %v1814
      %v1817 = vsel %vm317, %v1816, %v1815
      %s1819 = scalar_lea.vmem %s177, 18
      %1820 = vst.msk [vmem:[%s1819] sm:$0x3f] %vm657, %v1817
      %v1821 = vsel %vm662, %v1808, 0.0
      %v1822 = vsel %vm663, %v1809, 0.0
      %v1823 = vsel %vm664, %v1810, 0.0
      %v1824 = vsel %vm650, %v1821, 0.0
      %v1825 = vsel %vm650, %v1822, 0.0
      %v1826 = vadd.f32 %v1824, %v1825
      %v1827 = vsel %vm671, %v1823, 0.0
      %v1828 = vadd.f32 %v1826, %v1827
      %1829 = vadd.xlane.f32.xlu0 %v1828
      %v1830 = vpop.xlane.xlu0 %1829
      %v1831 = vadd.f32 %v1448, %v1830
      %v1832 = vmul.f32 %v1821, %v1821
      %v1833 = vmul.f32 %v1822, %v1822
      %v1834 = vmul.f32 %v1823, %v1823
      %v1835 = vsel %vm650, %v1832, 0.0
      %v1836 = vsel %vm650, %v1833, 0.0
      %v1837 = vadd.f32 %v1835, %v1836
      %v1838 = vsel %vm671, %v1834, 0.0
      %v1839 = vadd.f32 %v1837, %v1838
      %1840 = vadd.xlane.f32.xlu0 %v1839
      %v1841 = vpop.xlane.xlu0 %1840
      %v1842 = vadd.f32 %v1459, %v1841
      %vm1843 = vcmask 1024
      %1844 = vst.msk [vmem:[%s181] sm:$0x3] %vm1843, %v1831
      %vm1845 = vcmask 9224
      %1846 = vst.msk [vmem:[%s181] sm:$0x3] %vm1845, %v1842
      %p1847 = scmp.lt.s32.totalorder %s15, 1
      %s1848 = scalar_select %p1847, %s15, 1
      %s1849 = smul.addr %s1848, 12
      %s1850 = smul.addr %s1849, 2
      %s1851 = scalar_lea.vmem %s2, %s1850
      %p1852 = scmp.lt.s32.totalorder %s15, 1
      %s1853 = scalar_select %p1852, %s15, 1
      %s1854 = smul.addr %s1853, 2
      %s1855 = scalar_lea.vmem %s3, %s1854
      // Predicated region
      $region29: #{upsample_forward.1} parent=27 // pred_check
        %p1856 = pneg %p80
      $region30: #{upsample_forward.1} parent=27 // pred_check_branch
        %1858 = sbr.rel (%p1856) target = $region32
      $region31: #{upsample_forward.1} parent=27 // pred_region
        _
      $region32: #{upsample_forward.1} parent=27 // pred_fallthru
        _
      // Predicated region
      $region33: #{upsample_forward.1} parent=27 // pred_check
        %p1859 = pneg %p106
      $region34: #{upsample_forward.1} parent=27 // pred_check_branch
        %1861 = sbr.rel (%p1859) target = $region36
      $region35: #{upsample_forward.1} parent=27 // pred_region
        _
      $region36: #{upsample_forward.1} parent=27 // pred_fallthru
        _
    $region28: #{upsample_forward.1} parent=5 // pred_fallthru
      _
    %p1862 = scmp.le.s32.totalorder 2, %s10
    // Predicated region
    $region37: #{upsample_forward.1} parent=5 // pred_check
      %p1863 = pneg %p1862
    $region38: #{upsample_forward.1} parent=5 // pred_check_branch
      %1865 = sbr.rel (%p1863) target = $region40
    $region39: #{upsample_forward.1} parent=5 // pred_region
      %s1866 = ssub.s32 %s10, 2
      // Predicated region
      $region41: #{upsample_forward.1} parent=39 // pred_check
        %p1867 = pneg %p86
      $region42: #{upsample_forward.1} parent=39 // pred_check_branch
        %1869 = sbr.rel (%p1867) target = $region44
      $region43: #{upsample_forward.1} parent=39 // pred_region
        %p1870 = scmp.lt.s32.totalorder %s16, 1
        %s1871 = scalar_select %p1870, %s16, 1
        %s1872 = smul.addr %s1871, 12
        %s1873 = smul.addr %s1872, 2
        %s1874 = scalar_lea.vmem %s2, %s1873
      $region44: #{upsample_forward.1} parent=39 // pred_fallthru
        _
      // Predicated region
      $region45: #{upsample_forward.1} parent=39 // pred_check
        %p1875 = pneg %p112
      $region46: #{upsample_forward.1} parent=39 // pred_check_branch
        %1877 = sbr.rel (%p1875) target = $region48
      $region47: #{upsample_forward.1} parent=39 // pred_region
        %p1878 = scmp.lt.s32.totalorder %s16, 1
        %s1879 = scalar_select %p1878, %s16, 1
        %s1880 = smul.addr %s1879, 2
        %s1881 = scalar_lea.vmem %s3, %s1880
      $region48: #{upsample_forward.1} parent=39 // pred_fallthru
        _
    $region40: #{upsample_forward.1} parent=5 // pred_fallthru
      _
  $region6: #{upsample_forward.1} parent=0 // loop_footer
    %s14 = sadd.s32 1, %s10
  $region7: #{upsample_forward.1} parent=0 // loop_footer_branch
    %9 = sbr.rel target = $region3
  $region8: #{upsample_forward.1} parent=0 // loop_exit
    _

</llo_original>
